<compile_context>
chip_gen: v6e
topology: v6e:2x2x1
jax: 0.10.0
libtpu: 0.0.40
codegen_flags: <defaults>
</compile_context>

<pallas_src>
from functools import partial

import jax
import jax.numpy as jnp
from jax import lax
from jax.experimental import pallas as pl
from jax.experimental.pallas import tpu as pltpu


def _sanet_kernel(content_ref, style_ref, smean_ref, srstd_ref,
                  w1t_ref, w2t_ref, w3t_ref,
                  b1_ref, b2_ref, b3_ref,
                  o_ref, c_acc):
    # content_ref : (1, N, C)   full flattened channels-last content (one batch elem)
    # style_ref   : (1, TJ, C)  one tile of style positions
    # smean/srstd : (1, 1, C)   precomputed style instance-norm stats for this batch
    # w*t_ref     : (C, C)      1x1 conv weights transposed to (Cin, Cout)
    # b*_ref      : (1, C)      biases
    # o_ref       : (1, N, C)   output, resident & accumulated across style tiles
    # c_acc       : (N, C) f32  scratch: conv1(norm_content), computed once per b
    j = pl.program_id(1)
    eps = 1e-5

    @pl.when(j == 0)
    def _init():
        x = content_ref[0]                                       # (N, C)
        n = x.shape[0]
        mean = jnp.mean(x, axis=0, keepdims=True)                # (1, C)
        diff = x - mean
        var = jnp.sum(diff * diff, axis=0, keepdims=True) * (1.0 / (n - 1))
        norm_c = diff * lax.rsqrt(var + eps)
        c_acc[...] = (jnp.dot(norm_c, w1t_ref[...],
                              preferred_element_type=jnp.float32)
                      + b1_ref[...])
        o_ref[...] = jnp.zeros_like(o_ref)

    sty = style_ref[0]                                           # (TJ, C)
    norm_s = (sty - smean_ref[0]) * srstd_ref[0]
    s1 = (jnp.dot(norm_s, w2t_ref[...], preferred_element_type=jnp.float32)
          + b2_ref[...])                                         # (TJ, C)
    s2 = (jnp.dot(sty, w3t_ref[...], preferred_element_type=jnp.float32)
          + b3_ref[...])                                         # (TJ, C)

    c_feat = c_acc[...]                                          # (N, C)
    logits = jnp.dot(c_feat, s1.T,
                     preferred_element_type=jnp.float32)         # (N_c, TJ)
    # softmax over the content axis (dim=1 of the (B, HW_c, HW_s) tensor)
    m = jnp.max(logits, axis=0, keepdims=True)                   # (1, TJ)
    p = jnp.exp(logits - m)
    denom = jnp.sum(p, axis=0, keepdims=True)                    # (1, TJ)
    attn = p / denom                                             # (N_c, TJ)
    o_ref[0] += jnp.dot(attn, s2,
                        preferred_element_type=jnp.float32).astype(o_ref.dtype)


@partial(jax.jit, static_argnames=("style_tile",))
def sanet_forward(content, style, w1, b1, w2, b2, w3, b3, *, style_tile=None):
    """content, style: (B, C, H, W) f32; w*: (Cout, Cin) from 1x1 convs; b*: (Cout,)."""
    B, C, d2, d3 = content.shape
    N = d2 * d3
    eps = 1e-5

    # NCHW -> (B, HW, C) channels-last flattened.
    # TODO(synk): carry channels-last through adjacent layers to drop these relayouts.
    cf = jnp.transpose(content.reshape(B, C, N), (0, 2, 1))
    sf = jnp.transpose(style.reshape(B, C, N), (0, 2, 1))

    # Style instance-norm stats (unbiased var, eps inside the sqrt). Done once here
    # because `style` is tiled along its spatial axis inside the kernel.
    smean = jnp.mean(sf, axis=1, keepdims=True)                          # (B, 1, C)
    svar = jnp.sum((sf - smean) ** 2, axis=1, keepdims=True) / (N - 1)
    srstd = lax.rsqrt(svar + eps)                                        # (B, 1, C)

    w1t, w2t, w3t = w1.T, w2.T, w3.T                                     # (Cin, Cout)
    b1r, b2r, b3r = b1.reshape(1, C), b2.reshape(1, C), b3.reshape(1, C)

    if style_tile is None:
        style_tile = 128 if N % 128 == 0 else N
    assert N % style_tile == 0, "style_tile must divide H*W"
    n_j = N // style_tile

    out_bnc = pl.pallas_call(
        _sanet_kernel,
        out_shape=jax.ShapeDtypeStruct((B, N, C), jnp.float32),
        grid_spec=pltpu.PrefetchScalarGridSpec(
            num_scalar_prefetch=0,
            grid=(B, n_j),
            in_specs=[
                pl.BlockSpec((1, N, C), lambda b, j: (b, 0, 0)),            # content
                pl.BlockSpec((1, style_tile, C), lambda b, j: (b, j, 0)),   # style tile
                pl.BlockSpec((1, 1, C), lambda b, j: (b, 0, 0)),            # style mean
                pl.BlockSpec((1, 1, C), lambda b, j: (b, 0, 0)),            # style rstd
                pl.BlockSpec((C, C), lambda b, j: (0, 0)),                  # w1^T
                pl.BlockSpec((C, C), lambda b, j: (0, 0)),                  # w2^T
                pl.BlockSpec((C, C), lambda b, j: (0, 0)),                  # w3^T
                pl.BlockSpec((1, C), lambda b, j: (0, 0)),                  # b1
                pl.BlockSpec((1, C), lambda b, j: (0, 0)),                  # b2
                pl.BlockSpec((1, C), lambda b, j: (0, 0)),                  # b3
            ],
            out_specs=pl.BlockSpec((1, N, C), lambda b, j: (b, 0, 0)),
            scratch_shapes=[pltpu.VMEM((N, C), jnp.float32)],
        ),
        compiler_params=pltpu.CompilerParams(
            dimension_semantics=("parallel", "arbitrary"),
            vmem_limit_bytes=32 * 1024 * 1024,
        ),
    )(cf, sf, smean, srstd, w1t, w2t, w3t, b1r, b2r, b3r)

    # (B, HW_c, C) -> (B, C, HW_c) -> .view(B, C, height, width), exactly as PyTorch.
    return jnp.transpose(out_bnc, (0, 2, 1)).reshape(B, C, d3, d2)


def sanet_reference(content, style, w1, b1, w2, b2, w3, b3):
    """Pure-JAX reference mirroring the PyTorch SANet forward (correctness check)."""
    eps = 1e-5
    B, C, d2, d3 = content.shape
    N = d2 * d3

    def instance_norm(f):
        ff = f.reshape(B, C, N)
        mean = jnp.mean(ff, axis=2, keepdims=True)
        var = jnp.var(ff, axis=2, ddof=1, keepdims=True) + eps   # unbiased, eps in sqrt
        return (ff - mean) / jnp.sqrt(var)                       # (B, C, N)

    nc = instance_norm(content)
    ns = instance_norm(style)
    c = jnp.einsum("oc,bcn->bon", w1, nc) + b1[None, :, None]
    s1 = jnp.einsum("oc,bcn->bon", w2, ns) + b2[None, :, None]
    s2 = (jnp.einsum("oc,bcn->bon", w3, style.reshape(B, C, N))
          + b3[None, :, None])
    logits = jnp.einsum("bcn,bcm->bnm", c, s1)                   # (B, HW_c, HW_s)
    attn = jax.nn.softmax(logits, axis=1)                        # nn.Softmax(dim=1)
    out = jnp.einsum("bcm,bnm->bcn", s2, attn)                   # bmm(s2, attn^T)
    return out.reshape(B, C, d3, d2)


if __name__ == "__main__":
    # Small SANet: base=128 channels, 16x16 feature maps, batch 2.
    B, base, H, W = 2, 128, 16, 16

    key = jax.random.PRNGKey(0)
    kc, ks, kw1, kw2, kw3, kb1, kb2, kb3 = jax.random.split(key, 8)
    content = jax.random.normal(kc, (B, base, H, W), dtype=jnp.float32)
    style = jax.random.normal(ks, (B, base, H, W), dtype=jnp.float32)

    # nn.Conv2d(base, base, 1) parameters (1x1 kernels squeezed to (Cout, Cin)).
    bound = 1.0 / (base ** 0.5)

    def u(k, shape):
        return jax.random.uniform(k, shape, jnp.float32, -bound, bound)

    w1, w2, w3 = u(kw1, (base, base)), u(kw2, (base, base)), u(kw3, (base, base))
    b1, b2, b3 = u(kb1, (base,)), u(kb2, (base,)), u(kb3, (base,))

    out = jax.block_until_ready(
        sanet_forward(content, style, w1, b1, w2, b2, w3, b3))
    ref = jax.block_until_ready(
        sanet_reference(content, style, w1, b1, w2, b2, w3, b3))

    if out.shape == ref.shape and bool(jnp.allclose(out, ref, atol=2e-2, rtol=2e-2)):
        print("KERNEL_OK")
    else:
        max_err = float(jnp.max(jnp.abs(out - ref)))
        print(f"MISMATCH shape={out.shape} vs {ref.shape} max_abs_err={max_err:.3e}")
</pallas_src>

<mosaic_0001>
module attributes {stable_mosaic.version = 11 : i64} {
  func.func @_sanet_kernel(%arg0: i32, %arg1: i32, %arg2: memref<1x256x128xf32, #tpu.memory_space<vmem>>, %arg3: memref<1x128x128xf32, #tpu.memory_space<vmem>>, %arg4: memref<1x1x128xf32, #tpu.memory_space<vmem>>, %arg5: memref<1x1x128xf32, #tpu.memory_space<vmem>>, %arg6: memref<128x128xf32, #tpu.memory_space<vmem>>, %arg7: memref<128x128xf32, #tpu.memory_space<vmem>>, %arg8: memref<128x128xf32, #tpu.memory_space<vmem>>, %arg9: memref<1x128xf32, #tpu.memory_space<vmem>>, %arg10: memref<1x128xf32, #tpu.memory_space<vmem>>, %arg11: memref<1x128xf32, #tpu.memory_space<vmem>>, %arg12: memref<1x256x128xf32, #tpu.memory_space<vmem>>, %arg13: memref<256x128xf32, #tpu.memory_space<vmem>>) attributes {dimension_semantics = [#tpu.dimension_semantics<parallel>, #tpu.dimension_semantics<arbitrary>], iteration_bounds = array<i64: 2, 2>, scalar_prefetch = 0 : i64, scratch_operands = 1 : i64, tpu.core_type = #tpu.core_type<tc>, window_params = [{transform_indices = @transform_0, window_bounds = array<i64: 1, 256, 128>}, {transform_indices = @transform_1, window_bounds = array<i64: 1, 128, 128>}, {transform_indices = @transform_2, window_bounds = array<i64: 1, 1, 128>}, {transform_indices = @transform_3, window_bounds = array<i64: 1, 1, 128>}, {pipeline_mode = #tpu.pipeline_mode<synchronous>, transform_indices = @transform_4, window_bounds = array<i64: 128, 128>}, {pipeline_mode = #tpu.pipeline_mode<synchronous>, transform_indices = @transform_5, window_bounds = array<i64: 128, 128>}, {pipeline_mode = #tpu.pipeline_mode<synchronous>, transform_indices = @transform_6, window_bounds = array<i64: 128, 128>}, {pipeline_mode = #tpu.pipeline_mode<synchronous>, transform_indices = @transform_7, window_bounds = array<i64: 1, 128>}, {pipeline_mode = #tpu.pipeline_mode<synchronous>, transform_indices = @transform_8, window_bounds = array<i64: 1, 128>}, {pipeline_mode = #tpu.pipeline_mode<synchronous>, transform_indices = @transform_9, window_bounds = array<i64: 1, 128>}, {transform_indices = @transform_10, window_bounds = array<i64: 1, 256, 128>}]} {
    %c0_i32 = arith.constant 0 : i32
    %0 = arith.cmpi eq, %arg1, %c0_i32 : i32
    %1 = arith.extui %0 : i1 to i32
    %c0_i32_0 = arith.constant 0 : i32
    %2 = arith.cmpi ne, %1, %c0_i32_0 : i32
    scf.if %2 {
      %c0_30 = arith.constant 0 : index
      %c0_31 = arith.constant 0 : index
      %c0_32 = arith.constant 0 : index
      %42 = vector.load %arg2[%c0_30, %c0_31, %c0_32] : memref<1x256x128xf32, #tpu.memory_space<vmem>>, vector<1x256x128xf32>
      %43 = vector.shape_cast %42 : vector<1x256x128xf32> to vector<256x128xf32>
      %cst_33 = arith.constant dense<0.000000e+00> : vector<128xf32>
      %44 = vector.multi_reduction <add>, %43, %cst_33 [0] : vector<256x128xf32> to vector<128xf32>
      %45 = vector.shape_cast %44 : vector<128xf32> to vector<1x128xf32>
      %cst_34 = arith.constant 2.560000e+02 : f32
      %46 = vector.broadcast %cst_34 : f32 to vector<1x128xf32>
      %47 = arith.divf %45, %46 : vector<1x128xf32>
      %48 = vector.broadcast %47 : vector<1x128xf32> to vector<256x128xf32>
      %49 = arith.subf %43, %48 : vector<256x128xf32>
      %50 = arith.mulf %49, %49 : vector<256x128xf32>
      %cst_35 = arith.constant dense<0.000000e+00> : vector<128xf32>
      %51 = vector.multi_reduction <add>, %50, %cst_35 [0] : vector<256x128xf32> to vector<128xf32>
      %52 = vector.shape_cast %51 : vector<128xf32> to vector<1x128xf32>
      %cst_36 = arith.constant 0.00392156886 : f32
      %53 = vector.broadcast %cst_36 : f32 to vector<1x128xf32>
      %54 = arith.mulf %52, %53 : vector<1x128xf32>
      %cst_37 = arith.constant 9.99999974E-6 : f32
      %55 = vector.broadcast %cst_37 : f32 to vector<1x128xf32>
      %56 = arith.addf %54, %55 : vector<1x128xf32>
      %57 = math.rsqrt %56 : vector<1x128xf32>
      %58 = vector.broadcast %57 : vector<1x128xf32> to vector<256x128xf32>
      %59 = arith.mulf %49, %58 : vector<256x128xf32>
      %c0_38 = arith.constant 0 : index
      %c0_39 = arith.constant 0 : index
      %60 = vector.load %arg6[%c0_38, %c0_39] : memref<128x128xf32, #tpu.memory_space<vmem>>, vector<128x128xf32>
      %cst_40 = arith.constant dense<0.000000e+00> : vector<256x128xf32>
      %61 = tpu.matmul %59, %60, %cst_40 {dimension_numbers = #tpu.dot_dimension_numbers<[1], [0], [0], [1], [0, 0, 1, 1], [], []>} : vector<256x128xf32>, vector<128x128xf32>, vector<256x128xf32> -> vector<256x128xf32>
      %c0_41 = arith.constant 0 : index
      %c0_42 = arith.constant 0 : index
      %62 = vector.load %arg9[%c0_41, %c0_42] : memref<1x128xf32, #tpu.memory_space<vmem>>, vector<1x128xf32>
      %63 = vector.broadcast %62 : vector<1x128xf32> to vector<256x128xf32>
      %64 = arith.addf %61, %63 : vector<256x128xf32>
      %c0_43 = arith.constant 0 : index
      %c0_44 = arith.constant 0 : index
      %65 = vector.load %arg13[%c0_43, %c0_44] : memref<256x128xf32, #tpu.memory_space<vmem>>, vector<256x128xf32>
      tpu.vector_store %arg13[%c0_43, %c0_44], %64 {strides = array<i32>} : memref<256x128xf32, #tpu.memory_space<vmem>>, vector<256x128xf32>,
      %cst_45 = arith.constant 0.000000e+00 : f32
      %66 = vector.broadcast %cst_45 : f32 to vector<1x256x128xf32>
      %c0_46 = arith.constant 0 : index
      %c0_47 = arith.constant 0 : index
      %c0_48 = arith.constant 0 : index
      %67 = vector.load %arg12[%c0_46, %c0_47, %c0_48] : memref<1x256x128xf32, #tpu.memory_space<vmem>>, vector<1x256x128xf32>
      tpu.vector_store %arg12[%c0_46, %c0_47, %c0_48], %66 {strides = array<i32>} : memref<1x256x128xf32, #tpu.memory_space<vmem>>, vector<1x256x128xf32>,
    } else {
    }
    %c0 = arith.constant 0 : index
    %c0_1 = arith.constant 0 : index
    %c0_2 = arith.constant 0 : index
    %3 = vector.load %arg3[%c0, %c0_1, %c0_2] : memref<1x128x128xf32, #tpu.memory_space<vmem>>, vector<1x128x128xf32>
    %4 = vector.shape_cast %3 : vector<1x128x128xf32> to vector<128x128xf32>
    %c0_3 = arith.constant 0 : index
    %c0_4 = arith.constant 0 : index
    %c0_5 = arith.constant 0 : index
    %5 = vector.load %arg4[%c0_3, %c0_4, %c0_5] : memref<1x1x128xf32, #tpu.memory_space<vmem>>, vector<1x1x128xf32>
    %6 = vector.shape_cast %5 : vector<1x1x128xf32> to vector<1x128xf32>
    %7 = vector.broadcast %6 : vector<1x128xf32> to vector<128x128xf32>
    %8 = arith.subf %4, %7 : vector<128x128xf32>
    %c0_6 = arith.constant 0 : index
    %c0_7 = arith.constant 0 : index
    %c0_8 = arith.constant 0 : index
    %9 = vector.load %arg5[%c0_6, %c0_7, %c0_8] : memref<1x1x128xf32, #tpu.memory_space<vmem>>, vector<1x1x128xf32>
    %10 = vector.shape_cast %9 : vector<1x1x128xf32> to vector<1x128xf32>
    %11 = vector.broadcast %10 : vector<1x128xf32> to vector<128x128xf32>
    %12 = arith.mulf %8, %11 : vector<128x128xf32>
    %c0_9 = arith.constant 0 : index
    %c0_10 = arith.constant 0 : index
    %13 = vector.load %arg7[%c0_9, %c0_10] : memref<128x128xf32, #tpu.memory_space<vmem>>, vector<128x128xf32>
    %cst = arith.constant dense<0.000000e+00> : vector<128x128xf32>
    %14 = tpu.matmul %12, %13, %cst {dimension_numbers = #tpu.dot_dimension_numbers<[1], [0], [0], [1], [0, 0, 1, 1], [], []>} : vector<128x128xf32>, vector<128x128xf32>, vector<128x128xf32> -> vector<128x128xf32>
    %c0_11 = arith.constant 0 : index
    %c0_12 = arith.constant 0 : index
    %15 = vector.load %arg10[%c0_11, %c0_12] : memref<1x128xf32, #tpu.memory_space<vmem>>, vector<1x128xf32>
    %16 = vector.broadcast %15 : vector<1x128xf32> to vector<128x128xf32>
    %17 = arith.addf %14, %16 : vector<128x128xf32>
    %c0_13 = arith.constant 0 : index
    %c0_14 = arith.constant 0 : index
    %18 = vector.load %arg8[%c0_13, %c0_14] : memref<128x128xf32, #tpu.memory_space<vmem>>, vector<128x128xf32>
    %cst_15 = arith.constant dense<0.000000e+00> : vector<128x128xf32>
    %19 = tpu.matmul %4, %18, %cst_15 {dimension_numbers = #tpu.dot_dimension_numbers<[1], [0], [0], [1], [0, 0, 1, 1], [], []>} : vector<128x128xf32>, vector<128x128xf32>, vector<128x128xf32> -> vector<128x128xf32>
    %c0_16 = arith.constant 0 : index
    %c0_17 = arith.constant 0 : index
    %20 = vector.load %arg11[%c0_16, %c0_17] : memref<1x128xf32, #tpu.memory_space<vmem>>, vector<1x128xf32>
    %21 = vector.broadcast %20 : vector<1x128xf32> to vector<128x128xf32>
    %22 = arith.addf %19, %21 : vector<128x128xf32>
    %c0_18 = arith.constant 0 : index
    %c0_19 = arith.constant 0 : index
    %23 = vector.load %arg13[%c0_18, %c0_19] : memref<256x128xf32, #tpu.memory_space<vmem>>, vector<256x128xf32>
    %24 = tpu.transpose %17, [1, 0] : vector<128x128xf32> -> vector<128x128xf32>
    %cst_20 = arith.constant dense<0.000000e+00> : vector<256x128xf32>
    %25 = tpu.matmul %23, %24, %cst_20 {dimension_numbers = #tpu.dot_dimension_numbers<[1], [0], [0], [1], [0, 0, 1, 1], [], []>} : vector<256x128xf32>, vector<128x128xf32>, vector<256x128xf32> -> vector<256x128xf32>
    %cst_21 = arith.constant dense<0xFF800000> : vector<128xf32>
    %26 = vector.multi_reduction <maximumf>, %25, %cst_21 [0] : vector<256x128xf32> to vector<128xf32>
    %27 = vector.shape_cast %26 : vector<128xf32> to vector<1x128xf32>
    %28 = vector.broadcast %27 : vector<1x128xf32> to vector<256x128xf32>
    %29 = arith.subf %25, %28 : vector<256x128xf32>
    %30 = math.exp %29 : vector<256x128xf32>
    %cst_22 = arith.constant dense<0.000000e+00> : vector<128xf32>
    %31 = vector.multi_reduction <add>, %30, %cst_22 [0] : vector<256x128xf32> to vector<128xf32>
    %32 = vector.shape_cast %31 : vector<128xf32> to vector<1x128xf32>
    %33 = vector.broadcast %32 : vector<1x128xf32> to vector<256x128xf32>
    %34 = arith.divf %30, %33 : vector<256x128xf32>
    %c0_23 = arith.constant 0 : index
    %c0_24 = arith.constant 0 : index
    %c0_25 = arith.constant 0 : index
    %35 = vector.load %arg12[%c0_23, %c0_24, %c0_25] : memref<1x256x128xf32, #tpu.memory_space<vmem>>, vector<1x256x128xf32>
    %36 = vector.shape_cast %35 : vector<1x256x128xf32> to vector<256x128xf32>
    %cst_26 = arith.constant dense<0.000000e+00> : vector<256x128xf32>
    %37 = tpu.matmul %34, %22, %cst_26 {dimension_numbers = #tpu.dot_dimension_numbers<[1], [0], [0], [1], [0, 0, 1, 1], [], []>} : vector<256x128xf32>, vector<128x128xf32>, vector<256x128xf32> -> vector<256x128xf32>
    %38 = arith.addf %36, %37 : vector<256x128xf32>
    %c0_27 = arith.constant 0 : index
    %c0_28 = arith.constant 0 : index
    %c0_29 = arith.constant 0 : index
    %39 = vector.load %arg12[%c0_27, %c0_28, %c0_29] : memref<1x256x128xf32, #tpu.memory_space<vmem>>, vector<1x256x128xf32>
    %40 = vector.shape_cast %39 : vector<1x256x128xf32> to vector<256x128xf32>
    %41 = vector.shape_cast %38 : vector<256x128xf32> to vector<1x256x128xf32>
    tpu.vector_store %arg12[%c0_27, %c0_28, %c0_29], %41 {strides = array<i32>} : memref<1x256x128xf32, #tpu.memory_space<vmem>>, vector<1x256x128xf32>,
    return
  }
  func.func @transform_0(%arg0: i32, %arg1: i32) -> (i32, i32, i32) {
    %c0_i32 = arith.constant 0 : i32
    %c0_i32_0 = arith.constant 0 : i32
    %c0_i32_1 = arith.constant 0 : i32
    return %arg0, %c0_i32, %c0_i32_0 : i32, i32, i32
  }
  func.func @transform_1(%arg0: i32, %arg1: i32) -> (i32, i32, i32) {
    %c0_i32 = arith.constant 0 : i32
    %c0_i32_0 = arith.constant 0 : i32
    return %arg0, %arg1, %c0_i32 : i32, i32, i32
  }
  func.func @transform_2(%arg0: i32, %arg1: i32) -> (i32, i32, i32) {
    %c0_i32 = arith.constant 0 : i32
    %c0_i32_0 = arith.constant 0 : i32
    %c0_i32_1 = arith.constant 0 : i32
    return %arg0, %c0_i32, %c0_i32_0 : i32, i32, i32
  }
  func.func @transform_3(%arg0: i32, %arg1: i32) -> (i32, i32, i32) {
    %c0_i32 = arith.constant 0 : i32
    %c0_i32_0 = arith.constant 0 : i32
    %c0_i32_1 = arith.constant 0 : i32
    return %arg0, %c0_i32, %c0_i32_0 : i32, i32, i32
  }
  func.func @transform_4(%arg0: i32, %arg1: i32) -> (i32, i32) {
    %c0_i32 = arith.constant 0 : i32
    %c0_i32_0 = arith.constant 0 : i32
    %c0_i32_1 = arith.constant 0 : i32
    return %c0_i32, %c0_i32_0 : i32, i32
  }
  func.func @transform_5(%arg0: i32, %arg1: i32) -> (i32, i32) {
    %c0_i32 = arith.constant 0 : i32
    %c0_i32_0 = arith.constant 0 : i32
    %c0_i32_1 = arith.constant 0 : i32
    return %c0_i32, %c0_i32_0 : i32, i32
  }
  func.func @transform_6(%arg0: i32, %arg1: i32) -> (i32, i32) {
    %c0_i32 = arith.constant 0 : i32
    %c0_i32_0 = arith.constant 0 : i32
    %c0_i32_1 = arith.constant 0 : i32
    return %c0_i32, %c0_i32_0 : i32, i32
  }
  func.func @transform_7(%arg0: i32, %arg1: i32) -> (i32, i32) {
    %c0_i32 = arith.constant 0 : i32
    %c0_i32_0 = arith.constant 0 : i32
    %c0_i32_1 = arith.constant 0 : i32
    return %c0_i32, %c0_i32_0 : i32, i32
  }
  func.func @transform_8(%arg0: i32, %arg1: i32) -> (i32, i32) {
    %c0_i32 = arith.constant 0 : i32
    %c0_i32_0 = arith.constant 0 : i32
    %c0_i32_1 = arith.constant 0 : i32
    return %c0_i32, %c0_i32_0 : i32, i32
  }
  func.func @transform_9(%arg0: i32, %arg1: i32) -> (i32, i32) {
    %c0_i32 = arith.constant 0 : i32
    %c0_i32_0 = arith.constant 0 : i32
    %c0_i32_1 = arith.constant 0 : i32
    return %c0_i32, %c0_i32_0 : i32, i32
  }
  func.func @transform_10(%arg0: i32, %arg1: i32) -> (i32, i32, i32) {
    %c0_i32 = arith.constant 0 : i32
    %c0_i32_0 = arith.constant 0 : i32
    %c0_i32_1 = arith.constant 0 : i32
    return %arg0, %c0_i32, %c0_i32_0 : i32, i32, i32
  }
}

</mosaic_0001>

<llo_original>
// kernel: sanet_forward.1
$region0: #{sanet_forward.1}
  #allocation0 [shape = 'u32[]', space=smem, size = 0x4, offset = 0x4, fixed_abs, tag = 'smem constant byte address 0x4 - core index']
  #allocation1 [shape = 'u32[144,128]{1,0:T(1,128)}', space=vmem, size = 0x12000, scoped, tag = 'internal scratch']
  #allocation2 [shape = 'f32[256,128]{1,0:T(8,128)}', space=vmem, size = 0x20000, scoped, tag = 'scratch operand']
  %s0 = inlined_call_operand.vmem [shape: f32[2,256,128], index: 0, kind: input, shape index: {}]
  %s1 = inlined_call_operand.vmem [shape: f32[2,256,128], index: 1, kind: input, shape index: {}]
  %s2 = inlined_call_operand.vmem [shape: f32[2,1,128], index: 2, kind: input, shape index: {}]
  %s3 = inlined_call_operand.vmem [shape: f32[2,1,128], index: 3, kind: input, shape index: {}]
  %s4 = inlined_call_operand.vmem [shape: f32[128,128], index: 4, kind: input, shape index: {}]
  %s5 = inlined_call_operand.vmem [shape: f32[128,128], index: 5, kind: input, shape index: {}]
  %s6 = inlined_call_operand.vmem [shape: f32[128,128], index: 6, kind: input, shape index: {}]
  %s7 = inlined_call_operand.vmem [shape: f32[1,128], index: 7, kind: input, shape index: {}]
  %s8 = inlined_call_operand.vmem [shape: f32[1,128], index: 8, kind: input, shape index: {}]
  %s9 = inlined_call_operand.vmem [shape: f32[1,128], index: 9, kind: input, shape index: {}]
  %s10 = inlined_call_operand.hbm [shape: f32[2,256,128], index: 10, kind: output, shape index: {}]
  %s11 = sld [smem:[#allocation0]]
  $region77: #{sanet_forward.1} parent=0
    _
  %s13 = ssub.s32 1, %s11
  %s14 = scalar_select 0, %s13, %s11
  $region1: #{sanet_forward.1} parent=0
    #allocation3 [shape = 'u8[262144]{0}', space=vmem, size = 0x40000, scoped, tag = 'output window, operand 0']
    #allocation4 [shape = 's32[2]{0}', space=sflag, size = 0x8, scoped, tag = 'scoped memory for sanet_forward.1']
    %15 = vsyncpa [#allocation4], 0
    %s16 = scalar_lea.sflag [#allocation4], 1
    %17 = vsyncpa %s16, 0
    loop: start=0, step=1, limit=6
    $region2: #{sanet_forward.1} parent=1 // loop_pre_header
      _
    $region3: #{sanet_forward.1} parent=1 // loop_header
      %s19 = sphi 0, %s23
      %p20 = scmp.ge.s32.totalorder %s19, 6
      %s26 = sphi 0, %s38
      %s27 = sphi 0, %s34
      %s28 = sphi 0, %s26
      %s29 = sphi 0, %s27
      %s30 = sphi 0, %s28
      %s31 = sphi 0, %s29
      %s41 = sphi 0, %s43
      %s44 = sphi 0, %s41
      %s45 = sphi 0, %s44
      %s61 = sphi 0, %s45
      %s69 = sphi 0, %s71
      %s72 = sphi 0, %s69
      %s73 = sphi 0, %s72
      %s89 = sphi 0, %s73
      %s95 = sphi 0, %s97
      %s98 = sphi 0, %s95
      %s99 = sphi 0, %s98
      %s115 = sphi 0, %s99
      %s121 = sphi 0, %s123
      %s124 = sphi 0, %s121
      %s125 = sphi 0, %s124
      %s141 = sphi 0, %s125
      %s145 = sphi 0, %s145
      %s147 = sphi 0, %s145
      %s148 = sphi 0, %s147
      %s162 = sphi 0, %s148
      %s166 = sphi 0, %s166
      %s168 = sphi 0, %s166
      %s169 = sphi 0, %s168
      %s183 = sphi 0, %s169
      %s187 = sphi 0, %s187
      %s189 = sphi 0, %s187
      %s190 = sphi 0, %s189
      %s204 = sphi 0, %s190
      %s208 = sphi 0, %s208
      %s210 = sphi 0, %s208
      %s211 = sphi 0, %s210
      %s225 = sphi 0, %s211
      %s229 = sphi 0, %s229
      %s231 = sphi 0, %s229
      %s232 = sphi 0, %s231
      %s246 = sphi 0, %s232
      %s250 = sphi 0, %s250
      %s252 = sphi 0, %s250
      %s253 = sphi 0, %s252
      %s267 = sphi 0, %s253
      %s273 = sphi 0, %s275
      %s276 = sphi 0, %s273
      %s277 = sphi 0, %s276
      %s293 = sphi 0, %s277
    $region4: #{sanet_forward.1} parent=1 // loop_header_branch
      %22 = sbr.rel (%p20) target = $region8
    $region5: #{sanet_forward.1} parent=1 // loop_body
      %s24 = ssub.s32 %s19, 1
      %s25 = ssub.s32 %s19, 2
      %s32 = sadd.s32 1, %s27
      %p33 = scmp.ge.s32.totalorder %s32, 2
      %s34 = scalar_select %p33, 0, %s32
      %s35 = sadd.s32 1, %s26
      %s36 = scalar_select %p33, %s35, %s26
      %p37 = scmp.ge.s32.totalorder %s36, 2
      %s38 = scalar_select %p37, 0, %s36
      %s39 = ssub.s32 %s26, %s38
      %p40 = scmp.eq.s32.totalorder %s39, 0
      %s42 = sadd.s32 %s41, 1
      %s43 = scalar_select %p40, %s41, %s42
      %p46 = pneg %p40
      %p47 = scmp.eq.s32.totalorder %s19, 3
      %p48 = por %p46, %p47
      %p49 = scmp.ne.s32.totalorder %s41, %s44
      %p50 = scmp.eq.s32.totalorder %s19, 0
      %p51 = por %p49, %p50
      %p52 = scmp.ne.s32.totalorder %s41, %s44
      %p53 = scmp.eq.s32.totalorder %s24, 3
      %p54 = por %p52, %p53
      %p55 = scmp.ne.s32.totalorder %s44, %s45
      %p56 = scmp.eq.s32.totalorder %s24, 0
      %p57 = por %p55, %p56
      %p58 = scmp.ne.s32.totalorder %s44, %s45
      %p59 = scmp.eq.s32.totalorder %s25, 3
      %p60 = por %p58, %p59
      %p62 = scmp.ne.s32.totalorder %s45, %s61
      %p63 = scmp.eq.s32.totalorder %s25, 0
      %p64 = por %p62, %p63
      %s65 = ssub.s32 %s26, %s38
      %s66 = ssub.s32 %s27, %s34
      %s67 = sor.u32 %s65, %s66
      %p68 = scmp.eq.s32.totalorder %s67, 0
      %s70 = sadd.s32 %s69, 1
      %s71 = scalar_select %p68, %s69, %s70
      %p74 = pneg %p68
      %p75 = scmp.eq.s32.totalorder %s19, 3
      %p76 = por %p74, %p75
      %p77 = scmp.ne.s32.totalorder %s69, %s72
      %p78 = scmp.eq.s32.totalorder %s19, 0
      %p79 = por %p77, %p78
      %p80 = scmp.ne.s32.totalorder %s69, %s72
      %p81 = scmp.eq.s32.totalorder %s24, 3
      %p82 = por %p80, %p81
      %p83 = scmp.ne.s32.totalorder %s72, %s73
      %p84 = scmp.eq.s32.totalorder %s24, 0
      %p85 = por %p83, %p84
      %p86 = scmp.ne.s32.totalorder %s72, %s73
      %p87 = scmp.eq.s32.totalorder %s25, 3
      %p88 = por %p86, %p87
      %p90 = scmp.ne.s32.totalorder %s73, %s89
      %p91 = scmp.eq.s32.totalorder %s25, 0
      %p92 = por %p90, %p91
      %s93 = ssub.s32 %s26, %s38
      %p94 = scmp.eq.s32.totalorder %s93, 0
      %s96 = sadd.s32 %s95, 1
      %s97 = scalar_select %p94, %s95, %s96
      %p100 = pneg %p94
      %p101 = scmp.eq.s32.totalorder %s19, 3
      %p102 = por %p100, %p101
      %p103 = scmp.ne.s32.totalorder %s95, %s98
      %p104 = scmp.eq.s32.totalorder %s19, 0
      %p105 = por %p103, %p104
      %p106 = scmp.ne.s32.totalorder %s95, %s98
      %p107 = scmp.eq.s32.totalorder %s24, 3
      %p108 = por %p106, %p107
      %p109 = scmp.ne.s32.totalorder %s98, %s99
      %p110 = scmp.eq.s32.totalorder %s24, 0
      %p111 = por %p109, %p110
      %p112 = scmp.ne.s32.totalorder %s98, %s99
      %p113 = scmp.eq.s32.totalorder %s25, 3
      %p114 = por %p112, %p113
      %p116 = scmp.ne.s32.totalorder %s99, %s115
      %p117 = scmp.eq.s32.totalorder %s25, 0
      %p118 = por %p116, %p117
      %s119 = ssub.s32 %s26, %s38
      %p120 = scmp.eq.s32.totalorder %s119, 0
      %s122 = sadd.s32 %s121, 1
      %s123 = scalar_select %p120, %s121, %s122
      %p126 = pneg %p120
      %p127 = scmp.eq.s32.totalorder %s19, 3
      %p128 = por %p126, %p127
      %p129 = scmp.ne.s32.totalorder %s121, %s124
      %p130 = scmp.eq.s32.totalorder %s19, 0
      %p131 = por %p129, %p130
      %p132 = scmp.ne.s32.totalorder %s121, %s124
      %p133 = scmp.eq.s32.totalorder %s24, 3
      %p134 = por %p132, %p133
      %p135 = scmp.ne.s32.totalorder %s124, %s125
      %p136 = scmp.eq.s32.totalorder %s24, 0
      %p137 = por %p135, %p136
      %p138 = scmp.ne.s32.totalorder %s124, %s125
      %p139 = scmp.eq.s32.totalorder %s25, 3
      %p140 = por %p138, %p139
      %p142 = scmp.ne.s32.totalorder %s125, %s141
      %p143 = scmp.eq.s32.totalorder %s25, 0
      %p144 = por %p142, %p143
      %s146 = sadd.s32 %s145, 1
      %p149 = scmp.eq.s32.totalorder %s19, 3
      %p150 = scmp.ne.s32.totalorder %s145, %s147
      %p151 = scmp.eq.s32.totalorder %s19, 0
      %p152 = por %p150, %p151
      %p153 = scmp.ne.s32.totalorder %s145, %s147
      %p154 = scmp.eq.s32.totalorder %s24, 3
      %p155 = por %p153, %p154
      %p156 = scmp.ne.s32.totalorder %s147, %s148
      %p157 = scmp.eq.s32.totalorder %s24, 0
      %p158 = por %p156, %p157
      %p159 = scmp.ne.s32.totalorder %s147, %s148
      %p160 = scmp.eq.s32.totalorder %s25, 3
      %p161 = por %p159, %p160
      %p163 = scmp.ne.s32.totalorder %s148, %s162
      %p164 = scmp.eq.s32.totalorder %s25, 0
      %p165 = por %p163, %p164
      %s167 = sadd.s32 %s166, 1
      %p170 = scmp.eq.s32.totalorder %s19, 3
      %p171 = scmp.ne.s32.totalorder %s166, %s168
      %p172 = scmp.eq.s32.totalorder %s19, 0
      %p173 = por %p171, %p172
      %p174 = scmp.ne.s32.totalorder %s166, %s168
      %p175 = scmp.eq.s32.totalorder %s24, 3
      %p176 = por %p174, %p175
      %p177 = scmp.ne.s32.totalorder %s168, %s169
      %p178 = scmp.eq.s32.totalorder %s24, 0
      %p179 = por %p177, %p178
      %p180 = scmp.ne.s32.totalorder %s168, %s169
      %p181 = scmp.eq.s32.totalorder %s25, 3
      %p182 = por %p180, %p181
      %p184 = scmp.ne.s32.totalorder %s169, %s183
      %p185 = scmp.eq.s32.totalorder %s25, 0
      %p186 = por %p184, %p185
      %s188 = sadd.s32 %s187, 1
      %p191 = scmp.eq.s32.totalorder %s19, 3
      %p192 = scmp.ne.s32.totalorder %s187, %s189
      %p193 = scmp.eq.s32.totalorder %s19, 0
      %p194 = por %p192, %p193
      %p195 = scmp.ne.s32.totalorder %s187, %s189
      %p196 = scmp.eq.s32.totalorder %s24, 3
      %p197 = por %p195, %p196
      %p198 = scmp.ne.s32.totalorder %s189, %s190
      %p199 = scmp.eq.s32.totalorder %s24, 0
      %p200 = por %p198, %p199
      %p201 = scmp.ne.s32.totalorder %s189, %s190
      %p202 = scmp.eq.s32.totalorder %s25, 3
      %p203 = por %p201, %p202
      %p205 = scmp.ne.s32.totalorder %s190, %s204
      %p206 = scmp.eq.s32.totalorder %s25, 0
      %p207 = por %p205, %p206
      %s209 = sadd.s32 %s208, 1
      %p212 = scmp.eq.s32.totalorder %s19, 3
      %p213 = scmp.ne.s32.totalorder %s208, %s210
      %p214 = scmp.eq.s32.totalorder %s19, 0
      %p215 = por %p213, %p214
      %p216 = scmp.ne.s32.totalorder %s208, %s210
      %p217 = scmp.eq.s32.totalorder %s24, 3
      %p218 = por %p216, %p217
      %p219 = scmp.ne.s32.totalorder %s210, %s211
      %p220 = scmp.eq.s32.totalorder %s24, 0
      %p221 = por %p219, %p220
      %p222 = scmp.ne.s32.totalorder %s210, %s211
      %p223 = scmp.eq.s32.totalorder %s25, 3
      %p224 = por %p222, %p223
      %p226 = scmp.ne.s32.totalorder %s211, %s225
      %p227 = scmp.eq.s32.totalorder %s25, 0
      %p228 = por %p226, %p227
      %s230 = sadd.s32 %s229, 1
      %p233 = scmp.eq.s32.totalorder %s19, 3
      %p234 = scmp.ne.s32.totalorder %s229, %s231
      %p235 = scmp.eq.s32.totalorder %s19, 0
      %p236 = por %p234, %p235
      %p237 = scmp.ne.s32.totalorder %s229, %s231
      %p238 = scmp.eq.s32.totalorder %s24, 3
      %p239 = por %p237, %p238
      %p240 = scmp.ne.s32.totalorder %s231, %s232
      %p241 = scmp.eq.s32.totalorder %s24, 0
      %p242 = por %p240, %p241
      %p243 = scmp.ne.s32.totalorder %s231, %s232
      %p244 = scmp.eq.s32.totalorder %s25, 3
      %p245 = por %p243, %p244
      %p247 = scmp.ne.s32.totalorder %s232, %s246
      %p248 = scmp.eq.s32.totalorder %s25, 0
      %p249 = por %p247, %p248
      %s251 = sadd.s32 %s250, 1
      %p254 = scmp.eq.s32.totalorder %s19, 3
      %p255 = scmp.ne.s32.totalorder %s250, %s252
      %p256 = scmp.eq.s32.totalorder %s19, 0
      %p257 = por %p255, %p256
      %p258 = scmp.ne.s32.totalorder %s250, %s252
      %p259 = scmp.eq.s32.totalorder %s24, 3
      %p260 = por %p258, %p259
      %p261 = scmp.ne.s32.totalorder %s252, %s253
      %p262 = scmp.eq.s32.totalorder %s24, 0
      %p263 = por %p261, %p262
      %p264 = scmp.ne.s32.totalorder %s252, %s253
      %p265 = scmp.eq.s32.totalorder %s25, 3
      %p266 = por %p264, %p265
      %p268 = scmp.ne.s32.totalorder %s253, %s267
      %p269 = scmp.eq.s32.totalorder %s25, 0
      %p270 = por %p268, %p269
      %s271 = ssub.s32 %s26, %s38
      %p272 = scmp.eq.s32.totalorder %s271, 0
      %s274 = sadd.s32 %s273, 1
      %s275 = scalar_select %p272, %s273, %s274
      %p278 = pneg %p272
      %p279 = scmp.eq.s32.totalorder %s19, 3
      %p280 = por %p278, %p279
      %p281 = scmp.ne.s32.totalorder %s273, %s276
      %p282 = scmp.eq.s32.totalorder %s19, 0
      %p283 = por %p281, %p282
      %p284 = scmp.ne.s32.totalorder %s273, %s276
      %p285 = scmp.eq.s32.totalorder %s24, 3
      %p286 = por %p284, %p285
      %p287 = scmp.ne.s32.totalorder %s276, %s277
      %p288 = scmp.eq.s32.totalorder %s24, 0
      %p289 = por %p287, %p288
      %p290 = scmp.ne.s32.totalorder %s276, %s277
      %p291 = scmp.eq.s32.totalorder %s25, 3
      %p292 = por %p290, %p291
      %p294 = scmp.ne.s32.totalorder %s277, %s293
      %p295 = scmp.eq.s32.totalorder %s25, 0
      %p296 = por %p294, %p295
      %p297 = scmp.le.s32.totalorder 1, %s19
      %p298 = scmp.lt.s32.totalorder %s19, 5
      %p299 = pnand %p297, %p298
      %p300 = pneg %p299
      // Predicated region
      $region9: #{sanet_forward.1} parent=5 // pred_check
        _
      $region10: #{sanet_forward.1} parent=5 // pred_check_branch
        %302 = sbr.rel (%p299) target = $region12
      $region11: #{sanet_forward.1} parent=5 // pred_region
        %s303 = ssub.s32 %s19, 1
        // Predicated region
        $region13: #{sanet_forward.1} parent=11 // pred_check
          %p304 = pneg %p158
        $region14: #{sanet_forward.1} parent=11 // pred_check_branch
          %306 = sbr.rel (%p304) target = $region16
        $region15: #{sanet_forward.1} parent=11 // pred_region
          _
        $region16: #{sanet_forward.1} parent=11 // pred_fallthru
          _
        // Predicated region
        $region17: #{sanet_forward.1} parent=11 // pred_check
          %p307 = pneg %p179
        $region18: #{sanet_forward.1} parent=11 // pred_check_branch
          %309 = sbr.rel (%p307) target = $region20
        $region19: #{sanet_forward.1} parent=11 // pred_region
          _
        $region20: #{sanet_forward.1} parent=11 // pred_fallthru
          _
        // Predicated region
        $region21: #{sanet_forward.1} parent=11 // pred_check
          %p310 = pneg %p200
        $region22: #{sanet_forward.1} parent=11 // pred_check_branch
          %312 = sbr.rel (%p310) target = $region24
        $region23: #{sanet_forward.1} parent=11 // pred_region
          _
        $region24: #{sanet_forward.1} parent=11 // pred_fallthru
          _
        // Predicated region
        $region25: #{sanet_forward.1} parent=11 // pred_check
          %p313 = pneg %p221
        $region26: #{sanet_forward.1} parent=11 // pred_check_branch
          %315 = sbr.rel (%p313) target = $region28
        $region27: #{sanet_forward.1} parent=11 // pred_region
          _
        $region28: #{sanet_forward.1} parent=11 // pred_fallthru
          _
        // Predicated region
        $region29: #{sanet_forward.1} parent=11 // pred_check
          %p316 = pneg %p242
        $region30: #{sanet_forward.1} parent=11 // pred_check_branch
          %318 = sbr.rel (%p316) target = $region32
        $region31: #{sanet_forward.1} parent=11 // pred_region
          _
        $region32: #{sanet_forward.1} parent=11 // pred_fallthru
          _
        // Predicated region
        $region33: #{sanet_forward.1} parent=11 // pred_check
          %p319 = pneg %p263
        $region34: #{sanet_forward.1} parent=11 // pred_check_branch
          %321 = sbr.rel (%p319) target = $region36
        $region35: #{sanet_forward.1} parent=11 // pred_region
          _
        $region36: #{sanet_forward.1} parent=11 // pred_fallthru
          _
      $region12: #{sanet_forward.1} parent=5 // pred_fallthru
        _
      %p322 = scmp.lt.s32.totalorder %s19, 4
      // Predicated region
      $region37: #{sanet_forward.1} parent=5 // pred_check
        %p323 = pneg %p322
      $region38: #{sanet_forward.1} parent=5 // pred_check_branch
        %325 = sbr.rel (%p323) target = $region40
      $region39: #{sanet_forward.1} parent=5 // pred_region
        // Predicated region
        $region41: #{sanet_forward.1} parent=39 // pred_check
          %p326 = pneg %p51
        $region42: #{sanet_forward.1} parent=39 // pred_check_branch
          %328 = sbr.rel (%p326) target = $region44
        $region43: #{sanet_forward.1} parent=39 // pred_region
          %p329 = scmp.lt.s32.totalorder %s26, 1
          %s330 = scalar_select %p329, %s26, 1
          %s331 = smul.addr %s330, 32
          %s332 = smul.addr %s331, 8
          %s333 = scalar_lea.vmem %s0, %s332
        $region44: #{sanet_forward.1} parent=39 // pred_fallthru
          _
        // Predicated region
        $region45: #{sanet_forward.1} parent=39 // pred_check
          %p334 = pneg %p79
        $region46: #{sanet_forward.1} parent=39 // pred_check_branch
          %336 = sbr.rel (%p334) target = $region48
        $region47: #{sanet_forward.1} parent=39 // pred_region
          %s337 = smul.u32 16, %s27
          %p338 = scmp.lt.s32.totalorder %s26, 1
          %s339 = scalar_select %p338, %s26, 1
          %p340 = scmp.lt.s32.totalorder %s337, 31
          %s341 = scalar_select %p340, %s337, 31
          %s342 = smul.addr %s339, 32
          %s343 = sadd.s32 %s341, %s342
          %s344 = smul.addr %s343, 8
          %s345 = scalar_lea.vmem %s1, %s344
          %s346 = smul.u32 16, %s27
        $region48: #{sanet_forward.1} parent=39 // pred_fallthru
          _
        // Predicated region
        $region49: #{sanet_forward.1} parent=39 // pred_check
          %p347 = pneg %p105
        $region50: #{sanet_forward.1} parent=39 // pred_check_branch
          %349 = sbr.rel (%p347) target = $region52
        $region51: #{sanet_forward.1} parent=39 // pred_region
          %p350 = scmp.lt.s32.totalorder %s26, 1
          %s351 = scalar_select %p350, %s26, 1
          %s352 = scalar_lea.vmem %s2, %s351
        $region52: #{sanet_forward.1} parent=39 // pred_fallthru
          _
        // Predicated region
        $region53: #{sanet_forward.1} parent=39 // pred_check
          %p353 = pneg %p131
        $region54: #{sanet_forward.1} parent=39 // pred_check_branch
          %355 = sbr.rel (%p353) target = $region56
        $region55: #{sanet_forward.1} parent=39 // pred_region
          %p356 = scmp.lt.s32.totalorder %s26, 1
          %s357 = scalar_select %p356, %s26, 1
          %s358 = scalar_lea.vmem %s3, %s357
        $region56: #{sanet_forward.1} parent=39 // pred_fallthru
          _
      $region40: #{sanet_forward.1} parent=5 // pred_fallthru
        _
      %p359 = scmp.le.s32.totalorder 1, %s19
      %p360 = scmp.lt.s32.totalorder %s19, 5
      %p361 = pnand %p359, %p360
      %p362 = pneg %p361
      // Predicated region
      $region57: #{sanet_forward.1} parent=5 // pred_check
        _
      $region58: #{sanet_forward.1} parent=5 // pred_check_branch
        %364 = sbr.rel (%p361) target = $region60
      $region59: #{sanet_forward.1} parent=5 // pred_region
        %s365 = ssub.s32 %s19, 1
        %p366 = scmp.lt.s32.totalorder %s28, 1
        %s367 = scalar_select %p366, %s28, 1
        %s368 = smul.addr %s367, 32
        %s369 = smul.addr %s368, 8
        %s370 = scalar_lea.vmem %s0, %s369
        %p371 = pneg %p57
        %p372 = pneg %p54
        %s373 = smul.u32 16, %s29
        %p374 = scmp.lt.s32.totalorder %s28, 1
        %s375 = scalar_select %p374, %s28, 1
        %p376 = scmp.lt.s32.totalorder %s373, 31
        %s377 = scalar_select %p376, %s373, 31
        %s378 = smul.addr %s375, 32
        %s379 = sadd.s32 %s377, %s378
        %s380 = smul.addr %s379, 8
        %s381 = scalar_lea.vmem %s1, %s380
        %p382 = pneg %p85
        %p383 = pneg %p82
        %p384 = scmp.lt.s32.totalorder %s28, 1
        %s385 = scalar_select %p384, %s28, 1
        %s386 = scalar_lea.vmem %s2, %s385
        %p387 = pneg %p111
        %p388 = pneg %p108
        %p389 = scmp.lt.s32.totalorder %s28, 1
        %s390 = scalar_select %p389, %s28, 1
        %s391 = scalar_lea.vmem %s3, %s390
        %p392 = pneg %p137
        %p393 = pneg %p134
        %p394 = pneg %p158
        %p395 = pneg %p155
        %p396 = pneg %p179
        %p397 = pneg %p176
        %p398 = pneg %p200
        %p399 = pneg %p197
        %p400 = pneg %p221
        %p401 = pneg %p218
        %p402 = pneg %p242
        %p403 = pneg %p239
        %p404 = pneg %p263
        %p405 = pneg %p260
        %p406 = pneg %p289
        %p407 = pneg %p286
        %s408 = sand.u32 %s276, 1
        %s409 = scalar_lea.sflag [#allocation4], %s408
        %s410 = sand.u32 %s276, 1
        %s411 = smul.addr %s410, 256
        %s412 = scalar_lea.vmem [#allocation3], %s411
        %p413 = scmp.lt.s32.totalorder %s28, 1
        %s414 = scalar_select %p413, %s28, 1
        %s415 = smul.addr %s414, 32
        %s416 = smul.addr %s415, 8
        %s417 = scalar_lea.vmem %s0, %s416
        %s418 = smul.u32 16, %s29
        %p419 = scmp.lt.s32.totalorder %s28, 1
        %s420 = scalar_select %p419, %s28, 1
        %p421 = scmp.lt.s32.totalorder %s418, 31
        %s422 = scalar_select %p421, %s418, 31
        %s423 = smul.addr %s420, 32
        %s424 = sadd.s32 %s422, %s423
        %s425 = smul.addr %s424, 8
        %s426 = scalar_lea.vmem %s1, %s425
        %s427 = smul.u32 16, %s29
        %p428 = scmp.lt.s32.totalorder %s28, 1
        %s429 = scalar_select %p428, %s28, 1
        %s430 = scalar_lea.vmem %s2, %s429
        %p431 = scmp.lt.s32.totalorder %s28, 1
        %s432 = scalar_select %p431, %s28, 1
        %s433 = scalar_lea.vmem %s3, %s432
        %p434 = scmp.eq.s32.totalorder %s29, 0
        // Predicated region
        $region61: #{sanet_forward.1} parent=59 // pred_check
          %p435 = pneg %p434
        $region62: #{sanet_forward.1} parent=59 // pred_check_branch
          %437 = sbr.rel (%p435) target = $region64
        $region63: #{sanet_forward.1} parent=59 // pred_region
          %v438 = vld [vmem:[%s417] sm:$0xff]
          %v439 = vld [vmem:[%s417 + $0x8] sm:$0xff]
          %v440 = vld [vmem:[%s417 + $0x10] sm:$0xff]
          %v441 = vld [vmem:[%s417 + $0x18] sm:$0xff]
          %v442 = vld [vmem:[%s417 + $0x20] sm:$0xff]
          %v443 = vld [vmem:[%s417 + $0x28] sm:$0xff]
          %v444 = vld [vmem:[%s417 + $0x30] sm:$0xff]
          %v445 = vld [vmem:[%s417 + $0x38] sm:$0xff]
          %v446 = vld [vmem:[%s417 + $0x40] sm:$0xff]
          %v447 = vld [vmem:[%s417 + $0x48] sm:$0xff]
          %v448 = vld [vmem:[%s417 + $0x50] sm:$0xff]
          %v449 = vld [vmem:[%s417 + $0x58] sm:$0xff]
          %v450 = vld [vmem:[%s417 + $0x60] sm:$0xff]
          %v451 = vld [vmem:[%s417 + $0x68] sm:$0xff]
          %v452 = vld [vmem:[%s417 + $0x70] sm:$0xff]
          %v453 = vld [vmem:[%s417 + $0x78] sm:$0xff]
          %v454 = vld [vmem:[%s417 + $0x80] sm:$0xff]
          %v455 = vld [vmem:[%s417 + $0x88] sm:$0xff]
          %v456 = vld [vmem:[%s417 + $0x90] sm:$0xff]
          %v457 = vld [vmem:[%s417 + $0x98] sm:$0xff]
          %v458 = vld [vmem:[%s417 + $0xa0] sm:$0xff]
          %v459 = vld [vmem:[%s417 + $0xa8] sm:$0xff]
          %v460 = vld [vmem:[%s417 + $0xb0] sm:$0xff]
          %v461 = vld [vmem:[%s417 + $0xb8] sm:$0xff]
          %v462 = vld [vmem:[%s417 + $0xc0] sm:$0xff]
          %v463 = vld [vmem:[%s417 + $0xc8] sm:$0xff]
          %v464 = vld [vmem:[%s417 + $0xd0] sm:$0xff]
          %v465 = vld [vmem:[%s417 + $0xd8] sm:$0xff]
          %v466 = vld [vmem:[%s417 + $0xe0] sm:$0xff]
          %v467 = vld [vmem:[%s417 + $0xe8] sm:$0xff]
          %v468 = vld [vmem:[%s417 + $0xf0] sm:$0xff]
          %v469 = vld [vmem:[%s417 + $0xf8] sm:$0xff]
          %v470 = vadd.f32 %v438, %v439
          %v471 = vadd.f32 %v470, %v440
          %v472 = vadd.f32 %v471, %v441
          %v473 = vadd.f32 %v472, %v442
          %v474 = vadd.f32 %v473, %v443
          %v475 = vadd.f32 %v474, %v444
          %v476 = vadd.f32 %v475, %v445
          %v477 = vadd.f32 %v476, %v446
          %v478 = vadd.f32 %v477, %v447
          %v479 = vadd.f32 %v478, %v448
          %v480 = vadd.f32 %v479, %v449
          %v481 = vadd.f32 %v480, %v450
          %v482 = vadd.f32 %v481, %v451
          %v483 = vadd.f32 %v482, %v452
          %v484 = vadd.f32 %v483, %v453
          %v485 = vadd.f32 %v484, %v454
          %v486 = vadd.f32 %v485, %v455
          %v487 = vadd.f32 %v486, %v456
          %v488 = vadd.f32 %v487, %v457
          %v489 = vadd.f32 %v488, %v458
          %v490 = vadd.f32 %v489, %v459
          %v491 = vadd.f32 %v490, %v460
          %v492 = vadd.f32 %v491, %v461
          %v493 = vadd.f32 %v492, %v462
          %v494 = vadd.f32 %v493, %v463
          %v495 = vadd.f32 %v494, %v464
          %v496 = vadd.f32 %v495, %v465
          %v497 = vadd.f32 %v496, %v466
          %v498 = vadd.f32 %v497, %v467
          %v499 = vadd.f32 %v498, %v468
          %v500 = vadd.f32 %v499, %v469
          %v501 = vrot.slane %v500, 4
          %v502 = vadd.f32 %v500, %v501
          %v503 = vrot.slane %v502, 2
          %v504 = vadd.f32 %v502, %v503
          %v505 = vrot.slane %v504, 1
          %v506 = vadd.f32 %v504, %v505
          %v507 = vrcp.pop 256.0
          %v508 = vmul.f32 %v506, %v507
          %v509 = vsub.f32 %v438, %v508
          %v510 = vsub.f32 %v439, %v508
          %v511 = vsub.f32 %v440, %v508
          %v512 = vsub.f32 %v441, %v508
          %v513 = vsub.f32 %v442, %v508
          %v514 = vsub.f32 %v443, %v508
          %v515 = vsub.f32 %v444, %v508
          %v516 = vsub.f32 %v445, %v508
          %v517 = vsub.f32 %v446, %v508
          %v518 = vsub.f32 %v447, %v508
          %v519 = vsub.f32 %v448, %v508
          %v520 = vsub.f32 %v449, %v508
          %v521 = vsub.f32 %v450, %v508
          %v522 = vsub.f32 %v451, %v508
          %v523 = vsub.f32 %v452, %v508
          %v524 = vsub.f32 %v453, %v508
          %v525 = vsub.f32 %v454, %v508
          %v526 = vsub.f32 %v455, %v508
          %v527 = vsub.f32 %v456, %v508
          %v528 = vsub.f32 %v457, %v508
          %v529 = vsub.f32 %v458, %v508
          %v530 = vsub.f32 %v459, %v508
          %v531 = vsub.f32 %v460, %v508
          %v532 = vsub.f32 %v461, %v508
          %v533 = vsub.f32 %v462, %v508
          %v534 = vsub.f32 %v463, %v508
          %v535 = vsub.f32 %v464, %v508
          %v536 = vsub.f32 %v465, %v508
          %v537 = vsub.f32 %v466, %v508
          %v538 = vsub.f32 %v467, %v508
          %v539 = vsub.f32 %v468, %v508
          %v540 = vsub.f32 %v469, %v508
          %v541 = vmul.f32 %v509, %v509
          %v542 = vmul.f32 %v510, %v510
          %v543 = vmul.f32 %v511, %v511
          %v544 = vmul.f32 %v512, %v512
          %v545 = vmul.f32 %v513, %v513
          %v546 = vmul.f32 %v514, %v514
          %v547 = vmul.f32 %v515, %v515
          %v548 = vmul.f32 %v516, %v516
          %v549 = vmul.f32 %v517, %v517
          %v550 = vmul.f32 %v518, %v518
          %v551 = vmul.f32 %v519, %v519
          %v552 = vmul.f32 %v520, %v520
          %v553 = vmul.f32 %v521, %v521
          %v554 = vmul.f32 %v522, %v522
          %v555 = vmul.f32 %v523, %v523
          %v556 = vmul.f32 %v524, %v524
          %v557 = vmul.f32 %v525, %v525
          %v558 = vmul.f32 %v526, %v526
          %v559 = vmul.f32 %v527, %v527
          %v560 = vmul.f32 %v528, %v528
          %v561 = vmul.f32 %v529, %v529
          %v562 = vmul.f32 %v530, %v530
          %v563 = vmul.f32 %v531, %v531
          %v564 = vmul.f32 %v532, %v532
          %v565 = vmul.f32 %v533, %v533
          %v566 = vmul.f32 %v534, %v534
          %v567 = vmul.f32 %v535, %v535
          %v568 = vmul.f32 %v536, %v536
          %v569 = vmul.f32 %v537, %v537
          %v570 = vmul.f32 %v538, %v538
          %v571 = vmul.f32 %v539, %v539
          %v572 = vmul.f32 %v540, %v540
          %v573 = vadd.f32 %v541, %v542
          %v574 = vadd.f32 %v573, %v543
          %v575 = vadd.f32 %v574, %v544
          %v576 = vadd.f32 %v575, %v545
          %v577 = vadd.f32 %v576, %v546
          %v578 = vadd.f32 %v577, %v547
          %v579 = vadd.f32 %v578, %v548
          %v580 = vadd.f32 %v579, %v549
          %v581 = vadd.f32 %v580, %v550
          %v582 = vadd.f32 %v581, %v551
          %v583 = vadd.f32 %v582, %v552
          %v584 = vadd.f32 %v583, %v553
          %v585 = vadd.f32 %v584, %v554
          %v586 = vadd.f32 %v585, %v555
          %v587 = vadd.f32 %v586, %v556
          %v588 = vadd.f32 %v587, %v557
          %v589 = vadd.f32 %v588, %v558
          %v590 = vadd.f32 %v589, %v559
          %v591 = vadd.f32 %v590, %v560
          %v592 = vadd.f32 %v591, %v561
          %v593 = vadd.f32 %v592, %v562
          %v594 = vadd.f32 %v593, %v563
          %v595 = vadd.f32 %v594, %v564
          %v596 = vadd.f32 %v595, %v565
          %v597 = vadd.f32 %v596, %v566
          %v598 = vadd.f32 %v597, %v567
          %v599 = vadd.f32 %v598, %v568
          %v600 = vadd.f32 %v599, %v569
          %v601 = vadd.f32 %v600, %v570
          %v602 = vadd.f32 %v601, %v571
          %v603 = vadd.f32 %v602, %v572
          %v604 = vrot.slane %v603, 4
          %v605 = vadd.f32 %v603, %v604
          %v606 = vrot.slane %v605, 2
          %v607 = vadd.f32 %v605, %v606
          %v608 = vrot.slane %v607, 1
          %v609 = vadd.f32 %v607, %v608
          %v610 = vmul.f32 %v609, 0.003921569
          %v611 = vadd.f32 %v610, 1e-05
          %v612 = vrsqrt.pop %v611
          %v613 = vmul.f32 %v509, %v612
          %v614 = vmul.f32 %v510, %v612
          %v615 = vmul.f32 %v511, %v612
          %v616 = vmul.f32 %v512, %v612
          %v617 = vmul.f32 %v513, %v612
          %v618 = vmul.f32 %v514, %v612
          %v619 = vmul.f32 %v515, %v612
          %v620 = vmul.f32 %v516, %v612
          %v621 = vmul.f32 %v517, %v612
          %v622 = vmul.f32 %v518, %v612
          %v623 = vmul.f32 %v519, %v612
          %v624 = vmul.f32 %v520, %v612
          %v625 = vmul.f32 %v521, %v612
          %v626 = vmul.f32 %v522, %v612
          %v627 = vmul.f32 %v523, %v612
          %v628 = vmul.f32 %v524, %v612
          %v629 = vmul.f32 %v525, %v612
          %v630 = vmul.f32 %v526, %v612
          %v631 = vmul.f32 %v527, %v612
          %v632 = vmul.f32 %v528, %v612
          %v633 = vmul.f32 %v529, %v612
          %v634 = vmul.f32 %v530, %v612
          %v635 = vmul.f32 %v531, %v612
          %v636 = vmul.f32 %v532, %v612
          %v637 = vmul.f32 %v533, %v612
          %v638 = vmul.f32 %v534, %v612
          %v639 = vmul.f32 %v535, %v612
          %v640 = vmul.f32 %v536, %v612
          %v641 = vmul.f32 %v537, %v612
          %v642 = vmul.f32 %v538, %v612
          %v643 = vmul.f32 %v539, %v612
          %v644 = vmul.f32 %v540, %v612
          %v645 = vld [vmem:[%s4] sm:$0xff]
          %v646 = vld [vmem:[%s4 + $0x8] sm:$0xff]
          %v647 = vld [vmem:[%s4 + $0x10] sm:$0xff]
          %v648 = vld [vmem:[%s4 + $0x18] sm:$0xff]
          %v649 = vld [vmem:[%s4 + $0x20] sm:$0xff]
          %v650 = vld [vmem:[%s4 + $0x28] sm:$0xff]
          %v651 = vld [vmem:[%s4 + $0x30] sm:$0xff]
          %v652 = vld [vmem:[%s4 + $0x38] sm:$0xff]
          %v653 = vld [vmem:[%s4 + $0x40] sm:$0xff]
          %v654 = vld [vmem:[%s4 + $0x48] sm:$0xff]
          %v655 = vld [vmem:[%s4 + $0x50] sm:$0xff]
          %v656 = vld [vmem:[%s4 + $0x58] sm:$0xff]
          %v657 = vld [vmem:[%s4 + $0x60] sm:$0xff]
          %v658 = vld [vmem:[%s4 + $0x68] sm:$0xff]
          %v659 = vld [vmem:[%s4 + $0x70] sm:$0xff]
          %v660 = vld [vmem:[%s4 + $0x78] sm:$0xff]
          %v661 = vld [vmem:[%s7] sm:$0x1]
          %v663 = vlaneseq
          %v664 = vshrl.u32 %v663, 7
          %v665 = vsub.s32 0, %v664
          %v666 = vrot.slane %v661, %v665
          %668 = vmatprep.subr.mxu0 0.0
          %669 = vmatpush1.msra.mxu0 %v660
          %670 = vmatprep.subr.mxu0 0.0
          %671 = vmatpush1.msra.mxu0 %v659
          %672 = vmatprep.subr.mxu0 0.0
          %673 = vmatpush1.msra.mxu0 %v658
          %674 = vmatprep.subr.mxu0 0.0
          %675 = vmatpush1.msra.mxu0 %v657
          %676 = vmatprep.subr.mxu0 0.0
          %677 = vmatpush1.msra.mxu0 %v656
          %678 = vmatprep.subr.mxu0 0.0
          %679 = vmatpush1.msra.mxu0 %v655
          %680 = vmatprep.subr.mxu0 0.0
          %681 = vmatpush1.msra.mxu0 %v654
          %682 = vmatprep.subr.mxu0 0.0
          %683 = vmatpush1.msra.mxu0 %v653
          %684 = vmatprep.subr.mxu0 0.0
          %685 = vmatpush1.msra.mxu0 %v652
          %686 = vmatprep.subr.mxu0 0.0
          %687 = vmatpush1.msra.mxu0 %v651
          %688 = vmatprep.subr.mxu0 0.0
          %689 = vmatpush1.msra.mxu0 %v650
          %690 = vmatprep.subr.mxu0 0.0
          %691 = vmatpush1.msra.mxu0 %v649
          %692 = vmatprep.subr.mxu0 0.0
          %693 = vmatpush1.msra.mxu0 %v648
          %694 = vmatprep.subr.mxu0 0.0
          %695 = vmatpush1.msra.mxu0 %v647
          %696 = vmatprep.subr.mxu0 0.0
          %697 = vmatpush1.msra.mxu0 %v646
          %698 = vmatprep.subr.mxu0 0.0
          %699 = vmatpush1.msra.mxu0 %v645
          %700 = vmatprep.subr.mxu0 0.0
          %701 = vmatpush2.msra.mxu0 0.0
          %702 = vmatprep.subr.mxu0 0.0
          %703 = vmatpush2.msra.mxu0 0.0
          %704 = vmatprep.subr.mxu0 0.0
          %705 = vmatpush2.msra.mxu0 0.0
          %706 = vmatprep.subr.mxu0 0.0
          %707 = vmatpush2.msra.mxu0 0.0
          %708 = vmatprep.subr.mxu0 0.0
          %709 = vmatpush2.msra.mxu0 0.0
          %710 = vmatprep.subr.mxu0 0.0
          %711 = vmatpush2.msra.mxu0 0.0
          %712 = vmatprep.subr.mxu0 0.0
          %713 = vmatpush2.msra.mxu0 0.0
          %714 = vmatprep.subr.mxu0 0.0
          %715 = vmatpush2.msra.mxu0 0.0
          %716 = vmatprep.subr.mxu0 0.0
          %717 = vmatpush2.msra.mxu0 0.0
          %718 = vmatprep.subr.mxu0 0.0
          %719 = vmatpush2.msra.mxu0 0.0
          %720 = vmatprep.subr.mxu0 0.0
          %721 = vmatpush2.msra.mxu0 0.0
          %722 = vmatprep.subr.mxu0 0.0
          %723 = vmatpush2.msra.mxu0 0.0
          %724 = vmatprep.subr.mxu0 0.0
          %725 = vmatpush2.msra.mxu0 0.0
          %726 = vmatprep.subr.mxu0 0.0
          %727 = vmatpush2.msra.mxu0 0.0
          %728 = vmatprep.subr.mxu0 0.0
          %729 = vmatpush2.msra.mxu0 0.0
          %730 = vmatprep.subr.mxu0 0.0
          %731 = vmatpush2.msra.mxu0 0.0
          %732 = vmatprep.mubr.f32.mxu0 0.0
          %733 = vmatmul.mubr.f32.gmra.mxu0 %v613
          %v734 = vpop.f32.mrf.mxu0
          %v735 = vadd.f32 %v666, %v734
          %v736 = vpop.f32.mrf.mxu0
          %737 = vmatprep.mubr.f32.mxu0 0.0
          %738 = vmatmul.mubr.f32.gmra.mxu0 %v614
          %v739 = vpop.f32.mrf.mxu0
          %v740 = vadd.f32 %v666, %v739
          %v741 = vpop.f32.mrf.mxu0
          %742 = vmatprep.mubr.f32.mxu0 0.0
          %743 = vmatmul.mubr.f32.gmra.mxu0 %v615
          %v744 = vpop.f32.mrf.mxu0
          %v745 = vadd.f32 %v666, %v744
          %v746 = vpop.f32.mrf.mxu0
          %747 = vmatprep.mubr.f32.mxu0 0.0
          %748 = vmatmul.mubr.f32.gmra.mxu0 %v616
          %v749 = vpop.f32.mrf.mxu0
          %v750 = vadd.f32 %v666, %v749
          %v751 = vpop.f32.mrf.mxu0
          %752 = vmatprep.mubr.f32.mxu0 0.0
          %753 = vmatmul.mubr.f32.gmra.mxu0 %v617
          %v754 = vpop.f32.mrf.mxu0
          %v755 = vadd.f32 %v666, %v754
          %v756 = vpop.f32.mrf.mxu0
          %757 = vmatprep.mubr.f32.mxu0 0.0
          %758 = vmatmul.mubr.f32.gmra.mxu0 %v618
          %v759 = vpop.f32.mrf.mxu0
          %v760 = vadd.f32 %v666, %v759
          %v761 = vpop.f32.mrf.mxu0
          %762 = vmatprep.mubr.f32.mxu0 0.0
          %763 = vmatmul.mubr.f32.gmra.mxu0 %v619
          %v764 = vpop.f32.mrf.mxu0
          %v765 = vadd.f32 %v666, %v764
          %v766 = vpop.f32.mrf.mxu0
          %767 = vmatprep.mubr.f32.mxu0 0.0
          %768 = vmatmul.mubr.f32.gmra.mxu0 %v620
          %v769 = vpop.f32.mrf.mxu0
          %v770 = vadd.f32 %v666, %v769
          %v771 = vpop.f32.mrf.mxu0
          %772 = vmatprep.mubr.f32.mxu0 0.0
          %773 = vmatmul.mubr.f32.gmra.mxu0 %v621
          %v774 = vpop.f32.mrf.mxu0
          %v775 = vadd.f32 %v666, %v774
          %v776 = vpop.f32.mrf.mxu0
          %777 = vmatprep.mubr.f32.mxu0 0.0
          %778 = vmatmul.mubr.f32.gmra.mxu0 %v622
          %v779 = vpop.f32.mrf.mxu0
          %v780 = vadd.f32 %v666, %v779
          %v781 = vpop.f32.mrf.mxu0
          %782 = vmatprep.mubr.f32.mxu0 0.0
          %783 = vmatmul.mubr.f32.gmra.mxu0 %v623
          %v784 = vpop.f32.mrf.mxu0
          %v785 = vadd.f32 %v666, %v784
          %v786 = vpop.f32.mrf.mxu0
          %787 = vmatprep.mubr.f32.mxu0 0.0
          %788 = vmatmul.mubr.f32.gmra.mxu0 %v624
          %v789 = vpop.f32.mrf.mxu0
          %v790 = vadd.f32 %v666, %v789
          %v791 = vpop.f32.mrf.mxu0
          %792 = vmatprep.mubr.f32.mxu0 0.0
          %793 = vmatmul.mubr.f32.gmra.mxu0 %v625
          %v794 = vpop.f32.mrf.mxu0
          %v795 = vadd.f32 %v666, %v794
          %v796 = vpop.f32.mrf.mxu0
          %797 = vmatprep.mubr.f32.mxu0 0.0
          %798 = vmatmul.mubr.f32.gmra.mxu0 %v626
          %v799 = vpop.f32.mrf.mxu0
          %v800 = vadd.f32 %v666, %v799
          %v801 = vpop.f32.mrf.mxu0
          %802 = vmatprep.mubr.f32.mxu0 0.0
          %803 = vmatmul.mubr.f32.gmra.mxu0 %v627
          %v804 = vpop.f32.mrf.mxu0
          %v805 = vadd.f32 %v666, %v804
          %v806 = vpop.f32.mrf.mxu0
          %807 = vmatprep.mubr.f32.mxu0 0.0
          %808 = vmatmul.mubr.f32.gmra.mxu0 %v628
          %v809 = vpop.f32.mrf.mxu0
          %v810 = vadd.f32 %v666, %v809
          %v811 = vpop.f32.mrf.mxu0
          %812 = vmatprep.mubr.f32.mxu0 0.0
          %813 = vmatmul.mubr.f32.gmra.mxu0 %v629
          %v814 = vpop.f32.mrf.mxu0
          %v815 = vadd.f32 %v666, %v814
          %v816 = vpop.f32.mrf.mxu0
          %817 = vmatprep.mubr.f32.mxu0 0.0
          %818 = vmatmul.mubr.f32.gmra.mxu0 %v630
          %v819 = vpop.f32.mrf.mxu0
          %v820 = vadd.f32 %v666, %v819
          %v821 = vpop.f32.mrf.mxu0
          %822 = vmatprep.mubr.f32.mxu0 0.0
          %823 = vmatmul.mubr.f32.gmra.mxu0 %v631
          %v824 = vpop.f32.mrf.mxu0
          %v825 = vadd.f32 %v666, %v824
          %v826 = vpop.f32.mrf.mxu0
          %827 = vmatprep.mubr.f32.mxu0 0.0
          %828 = vmatmul.mubr.f32.gmra.mxu0 %v632
          %v829 = vpop.f32.mrf.mxu0
          %v830 = vadd.f32 %v666, %v829
          %v831 = vpop.f32.mrf.mxu0
          %832 = vmatprep.mubr.f32.mxu0 0.0
          %833 = vmatmul.mubr.f32.gmra.mxu0 %v633
          %v834 = vpop.f32.mrf.mxu0
          %v835 = vadd.f32 %v666, %v834
          %v836 = vpop.f32.mrf.mxu0
          %837 = vmatprep.mubr.f32.mxu0 0.0
          %838 = vmatmul.mubr.f32.gmra.mxu0 %v634
          %v839 = vpop.f32.mrf.mxu0
          %v840 = vadd.f32 %v666, %v839
          %v841 = vpop.f32.mrf.mxu0
          %842 = vmatprep.mubr.f32.mxu0 0.0
          %843 = vmatmul.mubr.f32.gmra.mxu0 %v635
          %v844 = vpop.f32.mrf.mxu0
          %v845 = vadd.f32 %v666, %v844
          %v846 = vpop.f32.mrf.mxu0
          %847 = vmatprep.mubr.f32.mxu0 0.0
          %848 = vmatmul.mubr.f32.gmra.mxu0 %v636
          %v849 = vpop.f32.mrf.mxu0
          %v850 = vadd.f32 %v666, %v849
          %v851 = vpop.f32.mrf.mxu0
          %852 = vmatprep.mubr.f32.mxu0 0.0
          %853 = vmatmul.mubr.f32.gmra.mxu0 %v637
          %v854 = vpop.f32.mrf.mxu0
          %v855 = vadd.f32 %v666, %v854
          %v856 = vpop.f32.mrf.mxu0
          %857 = vmatprep.mubr.f32.mxu0 0.0
          %858 = vmatmul.mubr.f32.gmra.mxu0 %v638
          %v859 = vpop.f32.mrf.mxu0
          %v860 = vadd.f32 %v666, %v859
          %v861 = vpop.f32.mrf.mxu0
          %862 = vmatprep.mubr.f32.mxu0 0.0
          %863 = vmatmul.mubr.f32.gmra.mxu0 %v639
          %v864 = vpop.f32.mrf.mxu0
          %v865 = vadd.f32 %v666, %v864
          %v866 = vpop.f32.mrf.mxu0
          %867 = vmatprep.mubr.f32.mxu0 0.0
          %868 = vmatmul.mubr.f32.gmra.mxu0 %v640
          %v869 = vpop.f32.mrf.mxu0
          %v870 = vadd.f32 %v666, %v869
          %v871 = vpop.f32.mrf.mxu0
          %872 = vmatprep.mubr.f32.mxu0 0.0
          %873 = vmatmul.mubr.f32.gmra.mxu0 %v641
          %v874 = vpop.f32.mrf.mxu0
          %v875 = vadd.f32 %v666, %v874
          %v876 = vpop.f32.mrf.mxu0
          %877 = vmatprep.mubr.f32.mxu0 0.0
          %878 = vmatmul.mubr.f32.gmra.mxu0 %v642
          %v879 = vpop.f32.mrf.mxu0
          %v880 = vadd.f32 %v666, %v879
          %v881 = vpop.f32.mrf.mxu0
          %882 = vmatprep.mubr.f32.mxu0 0.0
          %883 = vmatmul.mubr.f32.gmra.mxu0 %v643
          %v884 = vpop.f32.mrf.mxu0
          %v885 = vadd.f32 %v666, %v884
          %v886 = vpop.f32.mrf.mxu0
          %887 = vmatprep.mubr.f32.mxu0 0.0
          %888 = vmatmul.mubr.f32.gmra.mxu0 %v644
          %v889 = vpop.f32.mrf.mxu0
          %v890 = vadd.f32 %v666, %v889
          %v891 = vpop.f32.mrf.mxu0
          %892 = vdwg.mxu0
          %893 = vst [vmem:[#allocation2] sm:$0xff] %v735
          %894 = vst [vmem:[#allocation2 + $0x8] sm:$0xff] %v740
          %895 = vst [vmem:[#allocation2 + $0x10] sm:$0xff] %v745
          %896 = vst [vmem:[#allocation2 + $0x18] sm:$0xff] %v750
          %897 = vst [vmem:[#allocation2 + $0x20] sm:$0xff] %v755
          %898 = vst [vmem:[#allocation2 + $0x28] sm:$0xff] %v760
          %899 = vst [vmem:[#allocation2 + $0x30] sm:$0xff] %v765
          %900 = vst [vmem:[#allocation2 + $0x38] sm:$0xff] %v770
          %901 = vst [vmem:[#allocation2 + $0x40] sm:$0xff] %v775
          %902 = vst [vmem:[#allocation2 + $0x48] sm:$0xff] %v780
          %903 = vst [vmem:[#allocation2 + $0x50] sm:$0xff] %v785
          %904 = vst [vmem:[#allocation2 + $0x58] sm:$0xff] %v790
          %905 = vst [vmem:[#allocation2 + $0x60] sm:$0xff] %v795
          %906 = vst [vmem:[#allocation2 + $0x68] sm:$0xff] %v800
          %907 = vst [vmem:[#allocation2 + $0x70] sm:$0xff] %v805
          %908 = vst [vmem:[#allocation2 + $0x78] sm:$0xff] %v810
          %909 = vst [vmem:[#allocation2 + $0x80] sm:$0xff] %v815
          %910 = vst [vmem:[#allocation2 + $0x88] sm:$0xff] %v820
          %911 = vst [vmem:[#allocation2 + $0x90] sm:$0xff] %v825
          %912 = vst [vmem:[#allocation2 + $0x98] sm:$0xff] %v830
          %913 = vst [vmem:[#allocation2 + $0xa0] sm:$0xff] %v835
          %914 = vst [vmem:[#allocation2 + $0xa8] sm:$0xff] %v840
          %915 = vst [vmem:[#allocation2 + $0xb0] sm:$0xff] %v845
          %916 = vst [vmem:[#allocation2 + $0xb8] sm:$0xff] %v850
          %917 = vst [vmem:[#allocation2 + $0xc0] sm:$0xff] %v855
          %918 = vst [vmem:[#allocation2 + $0xc8] sm:$0xff] %v860
          %919 = vst [vmem:[#allocation2 + $0xd0] sm:$0xff] %v865
          %920 = vst [vmem:[#allocation2 + $0xd8] sm:$0xff] %v870
          %921 = vst [vmem:[#allocation2 + $0xe0] sm:$0xff] %v875
          %922 = vst [vmem:[#allocation2 + $0xe8] sm:$0xff] %v880
          %923 = vst [vmem:[#allocation2 + $0xf0] sm:$0xff] %v885
          %924 = vst [vmem:[#allocation2 + $0xf8] sm:$0xff] %v890
          %925 = vst [vmem:[%s412] sm:$0xff] 0.0
          %926 = vst [vmem:[%s412 + $0x8] sm:$0xff] 0.0
          %927 = vst [vmem:[%s412 + $0x10] sm:$0xff] 0.0
          %928 = vst [vmem:[%s412 + $0x18] sm:$0xff] 0.0
          %929 = vst [vmem:[%s412 + $0x20] sm:$0xff] 0.0
          %930 = vst [vmem:[%s412 + $0x28] sm:$0xff] 0.0
          %931 = vst [vmem:[%s412 + $0x30] sm:$0xff] 0.0
          %932 = vst [vmem:[%s412 + $0x38] sm:$0xff] 0.0
          %933 = vst [vmem:[%s412 + $0x40] sm:$0xff] 0.0
          %934 = vst [vmem:[%s412 + $0x48] sm:$0xff] 0.0
          %935 = vst [vmem:[%s412 + $0x50] sm:$0xff] 0.0
          %936 = vst [vmem:[%s412 + $0x58] sm:$0xff] 0.0
          %937 = vst [vmem:[%s412 + $0x60] sm:$0xff] 0.0
          %938 = vst [vmem:[%s412 + $0x68] sm:$0xff] 0.0
          %939 = vst [vmem:[%s412 + $0x70] sm:$0xff] 0.0
          %940 = vst [vmem:[%s412 + $0x78] sm:$0xff] 0.0
          %941 = vst [vmem:[%s412 + $0x80] sm:$0xff] 0.0
          %942 = vst [vmem:[%s412 + $0x88] sm:$0xff] 0.0
          %943 = vst [vmem:[%s412 + $0x90] sm:$0xff] 0.0
          %944 = vst [vmem:[%s412 + $0x98] sm:$0xff] 0.0
          %945 = vst [vmem:[%s412 + $0xa0] sm:$0xff] 0.0
          %946 = vst [vmem:[%s412 + $0xa8] sm:$0xff] 0.0
          %947 = vst [vmem:[%s412 + $0xb0] sm:$0xff] 0.0
          %948 = vst [vmem:[%s412 + $0xb8] sm:$0xff] 0.0
          %949 = vst [vmem:[%s412 + $0xc0] sm:$0xff] 0.0
          %950 = vst [vmem:[%s412 + $0xc8] sm:$0xff] 0.0
          %951 = vst [vmem:[%s412 + $0xd0] sm:$0xff] 0.0
          %952 = vst [vmem:[%s412 + $0xd8] sm:$0xff] 0.0
          %953 = vst [vmem:[%s412 + $0xe0] sm:$0xff] 0.0
          %954 = vst [vmem:[%s412 + $0xe8] sm:$0xff] 0.0
          %955 = vst [vmem:[%s412 + $0xf0] sm:$0xff] 0.0
          %956 = vst [vmem:[%s412 + $0xf8] sm:$0xff] 0.0
        $region64: #{sanet_forward.1} parent=59 // pred_fallthru
          _
        %v957 = vld [vmem:[%s426] sm:$0xff]
        %v958 = vld [vmem:[%s426 + $0x8] sm:$0xff]
        %v959 = vld [vmem:[%s426 + $0x10] sm:$0xff]
        %v960 = vld [vmem:[%s426 + $0x18] sm:$0xff]
        %v961 = vld [vmem:[%s426 + $0x20] sm:$0xff]
        %v962 = vld [vmem:[%s426 + $0x28] sm:$0xff]
        %v963 = vld [vmem:[%s426 + $0x30] sm:$0xff]
        %v964 = vld [vmem:[%s426 + $0x38] sm:$0xff]
        %v965 = vld [vmem:[%s426 + $0x40] sm:$0xff]
        %v966 = vld [vmem:[%s426 + $0x48] sm:$0xff]
        %v967 = vld [vmem:[%s426 + $0x50] sm:$0xff]
        %v968 = vld [vmem:[%s426 + $0x58] sm:$0xff]
        %v969 = vld [vmem:[%s426 + $0x60] sm:$0xff]
        %v970 = vld [vmem:[%s426 + $0x68] sm:$0xff]
        %v971 = vld [vmem:[%s426 + $0x70] sm:$0xff]
        %v972 = vld [vmem:[%s426 + $0x78] sm:$0xff]
        %v973 = vld [vmem:[%s430] sm:$0x1]
        %v975 = vlaneseq
        %v976 = vshrl.u32 %v975, 7
        %v977 = vsub.s32 0, %v976
        %v978 = vrot.slane %v973, %v977
        %v980 = vsub.f32 %v957, %v978
        %v981 = vsub.f32 %v958, %v978
        %v982 = vsub.f32 %v959, %v978
        %v983 = vsub.f32 %v960, %v978
        %v984 = vsub.f32 %v961, %v978
        %v985 = vsub.f32 %v962, %v978
        %v986 = vsub.f32 %v963, %v978
        %v987 = vsub.f32 %v964, %v978
        %v988 = vsub.f32 %v965, %v978
        %v989 = vsub.f32 %v966, %v978
        %v990 = vsub.f32 %v967, %v978
        %v991 = vsub.f32 %v968, %v978
        %v992 = vsub.f32 %v969, %v978
        %v993 = vsub.f32 %v970, %v978
        %v994 = vsub.f32 %v971, %v978
        %v995 = vsub.f32 %v972, %v978
        %v996 = vld [vmem:[%s433] sm:$0x1]
        %v998 = vlaneseq
        %v999 = vshrl.u32 %v998, 7
        %v1000 = vsub.s32 0, %v999
        %v1001 = vrot.slane %v996, %v1000
        %v1003 = vmul.f32 %v980, %v1001
        %v1004 = vmul.f32 %v981, %v1001
        %v1005 = vmul.f32 %v982, %v1001
        %v1006 = vmul.f32 %v983, %v1001
        %v1007 = vmul.f32 %v984, %v1001
        %v1008 = vmul.f32 %v985, %v1001
        %v1009 = vmul.f32 %v986, %v1001
        %v1010 = vmul.f32 %v987, %v1001
        %v1011 = vmul.f32 %v988, %v1001
        %v1012 = vmul.f32 %v989, %v1001
        %v1013 = vmul.f32 %v990, %v1001
        %v1014 = vmul.f32 %v991, %v1001
        %v1015 = vmul.f32 %v992, %v1001
        %v1016 = vmul.f32 %v993, %v1001
        %v1017 = vmul.f32 %v994, %v1001
        %v1018 = vmul.f32 %v995, %v1001
        %v1019 = vld [vmem:[%s5] sm:$0xff]
        %v1020 = vld [vmem:[%s5 + $0x8] sm:$0xff]
        %v1021 = vld [vmem:[%s5 + $0x10] sm:$0xff]
        %v1022 = vld [vmem:[%s5 + $0x18] sm:$0xff]
        %v1023 = vld [vmem:[%s5 + $0x20] sm:$0xff]
        %v1024 = vld [vmem:[%s5 + $0x28] sm:$0xff]
        %v1025 = vld [vmem:[%s5 + $0x30] sm:$0xff]
        %v1026 = vld [vmem:[%s5 + $0x38] sm:$0xff]
        %v1027 = vld [vmem:[%s5 + $0x40] sm:$0xff]
        %v1028 = vld [vmem:[%s5 + $0x48] sm:$0xff]
        %v1029 = vld [vmem:[%s5 + $0x50] sm:$0xff]
        %v1030 = vld [vmem:[%s5 + $0x58] sm:$0xff]
        %v1031 = vld [vmem:[%s5 + $0x60] sm:$0xff]
        %v1032 = vld [vmem:[%s5 + $0x68] sm:$0xff]
        %v1033 = vld [vmem:[%s5 + $0x70] sm:$0xff]
        %v1034 = vld [vmem:[%s5 + $0x78] sm:$0xff]
        %v1035 = vld [vmem:[%s8] sm:$0x1]
        %v1037 = vlaneseq
        %v1038 = vshrl.u32 %v1037, 7
        %v1039 = vsub.s32 0, %v1038
        %v1040 = vrot.slane %v1035, %v1039
        %1042 = vmatprep.subr.mxu0 0.0
        %1043 = vmatpush1.msra.mxu0 %v1034
        %1044 = vmatprep.subr.mxu0 0.0
        %1045 = vmatpush1.msra.mxu0 %v1033
        %1046 = vmatprep.subr.mxu0 0.0
        %1047 = vmatpush1.msra.mxu0 %v1032
        %1048 = vmatprep.subr.mxu0 0.0
        %1049 = vmatpush1.msra.mxu0 %v1031
        %1050 = vmatprep.subr.mxu0 0.0
        %1051 = vmatpush1.msra.mxu0 %v1030
        %1052 = vmatprep.subr.mxu0 0.0
        %1053 = vmatpush1.msra.mxu0 %v1029
        %1054 = vmatprep.subr.mxu0 0.0
        %1055 = vmatpush1.msra.mxu0 %v1028
        %1056 = vmatprep.subr.mxu0 0.0
        %1057 = vmatpush1.msra.mxu0 %v1027
        %1058 = vmatprep.subr.mxu0 0.0
        %1059 = vmatpush1.msra.mxu0 %v1026
        %1060 = vmatprep.subr.mxu0 0.0
        %1061 = vmatpush1.msra.mxu0 %v1025
        %1062 = vmatprep.subr.mxu0 0.0
        %1063 = vmatpush1.msra.mxu0 %v1024
        %1064 = vmatprep.subr.mxu0 0.0
        %1065 = vmatpush1.msra.mxu0 %v1023
        %1066 = vmatprep.subr.mxu0 0.0
        %1067 = vmatpush1.msra.mxu0 %v1022
        %1068 = vmatprep.subr.mxu0 0.0
        %1069 = vmatpush1.msra.mxu0 %v1021
        %1070 = vmatprep.subr.mxu0 0.0
        %1071 = vmatpush1.msra.mxu0 %v1020
        %1072 = vmatprep.subr.mxu0 0.0
        %1073 = vmatpush1.msra.mxu0 %v1019
        %1074 = vmatprep.subr.mxu0 0.0
        %1075 = vmatpush2.msra.mxu0 0.0
        %1076 = vmatprep.subr.mxu0 0.0
        %1077 = vmatpush2.msra.mxu0 0.0
        %1078 = vmatprep.subr.mxu0 0.0
        %1079 = vmatpush2.msra.mxu0 0.0
        %1080 = vmatprep.subr.mxu0 0.0
        %1081 = vmatpush2.msra.mxu0 0.0
        %1082 = vmatprep.subr.mxu0 0.0
        %1083 = vmatpush2.msra.mxu0 0.0
        %1084 = vmatprep.subr.mxu0 0.0
        %1085 = vmatpush2.msra.mxu0 0.0
        %1086 = vmatprep.subr.mxu0 0.0
        %1087 = vmatpush2.msra.mxu0 0.0
        %1088 = vmatprep.subr.mxu0 0.0
        %1089 = vmatpush2.msra.mxu0 0.0
        %1090 = vmatprep.subr.mxu0 0.0
        %1091 = vmatpush2.msra.mxu0 0.0
        %1092 = vmatprep.subr.mxu0 0.0
        %1093 = vmatpush2.msra.mxu0 0.0
        %1094 = vmatprep.subr.mxu0 0.0
        %1095 = vmatpush2.msra.mxu0 0.0
        %1096 = vmatprep.subr.mxu0 0.0
        %1097 = vmatpush2.msra.mxu0 0.0
        %1098 = vmatprep.subr.mxu0 0.0
        %1099 = vmatpush2.msra.mxu0 0.0
        %1100 = vmatprep.subr.mxu0 0.0
        %1101 = vmatpush2.msra.mxu0 0.0
        %1102 = vmatprep.subr.mxu0 0.0
        %1103 = vmatpush2.msra.mxu0 0.0
        %1104 = vmatprep.subr.mxu0 0.0
        %1105 = vmatpush2.msra.mxu0 0.0
        %1106 = vmatprep.mubr.f32.mxu0 0.0
        %1107 = vmatmul.mubr.f32.gmra.mxu0 %v1003
        %v1108 = vpop.f32.mrf.mxu0
        %v1109 = vadd.f32 %v1040, %v1108
        %v1110 = vpop.f32.mrf.mxu0
        %1111 = vmatprep.mubr.f32.mxu0 0.0
        %1112 = vmatmul.mubr.f32.gmra.mxu0 %v1004
        %v1113 = vpop.f32.mrf.mxu0
        %v1114 = vadd.f32 %v1040, %v1113
        %v1115 = vpop.f32.mrf.mxu0
        %1116 = vmatprep.mubr.f32.mxu0 0.0
        %1117 = vmatmul.mubr.f32.gmra.mxu0 %v1005
        %v1118 = vpop.f32.mrf.mxu0
        %v1119 = vadd.f32 %v1040, %v1118
        %v1120 = vpop.f32.mrf.mxu0
        %1121 = vmatprep.mubr.f32.mxu0 0.0
        %1122 = vmatmul.mubr.f32.gmra.mxu0 %v1006
        %v1123 = vpop.f32.mrf.mxu0
        %v1124 = vadd.f32 %v1040, %v1123
        %v1125 = vpop.f32.mrf.mxu0
        %1126 = vmatprep.mubr.f32.mxu0 0.0
        %1127 = vmatmul.mubr.f32.gmra.mxu0 %v1007
        %v1128 = vpop.f32.mrf.mxu0
        %v1129 = vadd.f32 %v1040, %v1128
        %v1130 = vpop.f32.mrf.mxu0
        %1131 = vmatprep.mubr.f32.mxu0 0.0
        %1132 = vmatmul.mubr.f32.gmra.mxu0 %v1008
        %v1133 = vpop.f32.mrf.mxu0
        %v1134 = vadd.f32 %v1040, %v1133
        %v1135 = vpop.f32.mrf.mxu0
        %1136 = vmatprep.mubr.f32.mxu0 0.0
        %1137 = vmatmul.mubr.f32.gmra.mxu0 %v1009
        %v1138 = vpop.f32.mrf.mxu0
        %v1139 = vadd.f32 %v1040, %v1138
        %v1140 = vpop.f32.mrf.mxu0
        %1141 = vmatprep.mubr.f32.mxu0 0.0
        %1142 = vmatmul.mubr.f32.gmra.mxu0 %v1010
        %v1143 = vpop.f32.mrf.mxu0
        %v1144 = vadd.f32 %v1040, %v1143
        %v1145 = vpop.f32.mrf.mxu0
        %1146 = vmatprep.mubr.f32.mxu0 0.0
        %1147 = vmatmul.mubr.f32.gmra.mxu0 %v1011
        %v1148 = vpop.f32.mrf.mxu0
        %v1149 = vadd.f32 %v1040, %v1148
        %v1150 = vpop.f32.mrf.mxu0
        %1151 = vmatprep.mubr.f32.mxu0 0.0
        %1152 = vmatmul.mubr.f32.gmra.mxu0 %v1012
        %v1153 = vpop.f32.mrf.mxu0
        %v1154 = vadd.f32 %v1040, %v1153
        %v1155 = vpop.f32.mrf.mxu0
        %1156 = vmatprep.mubr.f32.mxu0 0.0
        %1157 = vmatmul.mubr.f32.gmra.mxu0 %v1013
        %v1158 = vpop.f32.mrf.mxu0
        %v1159 = vadd.f32 %v1040, %v1158
        %v1160 = vpop.f32.mrf.mxu0
        %1161 = vmatprep.mubr.f32.mxu0 0.0
        %1162 = vmatmul.mubr.f32.gmra.mxu0 %v1014
        %v1163 = vpop.f32.mrf.mxu0
        %v1164 = vadd.f32 %v1040, %v1163
        %v1165 = vpop.f32.mrf.mxu0
        %1166 = vmatprep.mubr.f32.mxu0 0.0
        %1167 = vmatmul.mubr.f32.gmra.mxu0 %v1015
        %v1168 = vpop.f32.mrf.mxu0
        %v1169 = vadd.f32 %v1040, %v1168
        %v1170 = vpop.f32.mrf.mxu0
        %1171 = vmatprep.mubr.f32.mxu0 0.0
        %1172 = vmatmul.mubr.f32.gmra.mxu0 %v1016
        %v1173 = vpop.f32.mrf.mxu0
        %v1174 = vadd.f32 %v1040, %v1173
        %v1175 = vpop.f32.mrf.mxu0
        %1176 = vmatprep.mubr.f32.mxu0 0.0
        %1177 = vmatmul.mubr.f32.gmra.mxu0 %v1017
        %v1178 = vpop.f32.mrf.mxu0
        %v1179 = vadd.f32 %v1040, %v1178
        %v1180 = vpop.f32.mrf.mxu0
        %1181 = vmatprep.mubr.f32.mxu0 0.0
        %1182 = vmatmul.mubr.f32.gmra.mxu0 %v1018
        %v1183 = vpop.f32.mrf.mxu0
        %v1184 = vadd.f32 %v1040, %v1183
        %v1185 = vpop.f32.mrf.mxu0
        %1186 = vdwg.mxu0
        %v1187 = vld [vmem:[%s6] sm:$0xff]
        %v1188 = vld [vmem:[%s6 + $0x8] sm:$0xff]
        %v1189 = vld [vmem:[%s6 + $0x10] sm:$0xff]
        %v1190 = vld [vmem:[%s6 + $0x18] sm:$0xff]
        %v1191 = vld [vmem:[%s6 + $0x20] sm:$0xff]
        %v1192 = vld [vmem:[%s6 + $0x28] sm:$0xff]
        %v1193 = vld [vmem:[%s6 + $0x30] sm:$0xff]
        %v1194 = vld [vmem:[%s6 + $0x38] sm:$0xff]
        %v1195 = vld [vmem:[%s6 + $0x40] sm:$0xff]
        %v1196 = vld [vmem:[%s6 + $0x48] sm:$0xff]
        %v1197 = vld [vmem:[%s6 + $0x50] sm:$0xff]
        %v1198 = vld [vmem:[%s6 + $0x58] sm:$0xff]
        %v1199 = vld [vmem:[%s6 + $0x60] sm:$0xff]
        %v1200 = vld [vmem:[%s6 + $0x68] sm:$0xff]
        %v1201 = vld [vmem:[%s6 + $0x70] sm:$0xff]
        %v1202 = vld [vmem:[%s6 + $0x78] sm:$0xff]
        %v1203 = vld [vmem:[%s9] sm:$0x1]
        %v1205 = vlaneseq
        %v1206 = vshrl.u32 %v1205, 7
        %v1207 = vsub.s32 0, %v1206
        %v1208 = vrot.slane %v1203, %v1207
        %1210 = vmatprep.subr.mxu0 0.0
        %1211 = vmatpush1.msra.mxu0 %v1202
        %1212 = vmatprep.subr.mxu0 0.0
        %1213 = vmatpush1.msra.mxu0 %v1201
        %1214 = vmatprep.subr.mxu0 0.0
        %1215 = vmatpush1.msra.mxu0 %v1200
        %1216 = vmatprep.subr.mxu0 0.0
        %1217 = vmatpush1.msra.mxu0 %v1199
        %1218 = vmatprep.subr.mxu0 0.0
        %1219 = vmatpush1.msra.mxu0 %v1198
        %1220 = vmatprep.subr.mxu0 0.0
        %1221 = vmatpush1.msra.mxu0 %v1197
        %1222 = vmatprep.subr.mxu0 0.0
        %1223 = vmatpush1.msra.mxu0 %v1196
        %1224 = vmatprep.subr.mxu0 0.0
        %1225 = vmatpush1.msra.mxu0 %v1195
        %1226 = vmatprep.subr.mxu0 0.0
        %1227 = vmatpush1.msra.mxu0 %v1194
        %1228 = vmatprep.subr.mxu0 0.0
        %1229 = vmatpush1.msra.mxu0 %v1193
        %1230 = vmatprep.subr.mxu0 0.0
        %1231 = vmatpush1.msra.mxu0 %v1192
        %1232 = vmatprep.subr.mxu0 0.0
        %1233 = vmatpush1.msra.mxu0 %v1191
        %1234 = vmatprep.subr.mxu0 0.0
        %1235 = vmatpush1.msra.mxu0 %v1190
        %1236 = vmatprep.subr.mxu0 0.0
        %1237 = vmatpush1.msra.mxu0 %v1189
        %1238 = vmatprep.subr.mxu0 0.0
        %1239 = vmatpush1.msra.mxu0 %v1188
        %1240 = vmatprep.subr.mxu0 0.0
        %1241 = vmatpush1.msra.mxu0 %v1187
        %1242 = vmatprep.subr.mxu0 0.0
        %1243 = vmatpush2.msra.mxu0 0.0
        %1244 = vmatprep.subr.mxu0 0.0
        %1245 = vmatpush2.msra.mxu0 0.0
        %1246 = vmatprep.subr.mxu0 0.0
        %1247 = vmatpush2.msra.mxu0 0.0
        %1248 = vmatprep.subr.mxu0 0.0
        %1249 = vmatpush2.msra.mxu0 0.0
        %1250 = vmatprep.subr.mxu0 0.0
        %1251 = vmatpush2.msra.mxu0 0.0
        %1252 = vmatprep.subr.mxu0 0.0
        %1253 = vmatpush2.msra.mxu0 0.0
        %1254 = vmatprep.subr.mxu0 0.0
        %1255 = vmatpush2.msra.mxu0 0.0
        %1256 = vmatprep.subr.mxu0 0.0
        %1257 = vmatpush2.msra.mxu0 0.0
        %1258 = vmatprep.subr.mxu0 0.0
        %1259 = vmatpush2.msra.mxu0 0.0
        %1260 = vmatprep.subr.mxu0 0.0
        %1261 = vmatpush2.msra.mxu0 0.0
        %1262 = vmatprep.subr.mxu0 0.0
        %1263 = vmatpush2.msra.mxu0 0.0
        %1264 = vmatprep.subr.mxu0 0.0
        %1265 = vmatpush2.msra.mxu0 0.0
        %1266 = vmatprep.subr.mxu0 0.0
        %1267 = vmatpush2.msra.mxu0 0.0
        %1268 = vmatprep.subr.mxu0 0.0
        %1269 = vmatpush2.msra.mxu0 0.0
        %1270 = vmatprep.subr.mxu0 0.0
        %1271 = vmatpush2.msra.mxu0 0.0
        %1272 = vmatprep.subr.mxu0 0.0
        %1273 = vmatpush2.msra.mxu0 0.0
        %1274 = vmatprep.mubr.f32.mxu0 0.0
        %1275 = vmatmul.mubr.f32.gmra.mxu0 %v957
        %v1276 = vpop.f32.mrf.mxu0
        %v1277 = vadd.f32 %v1208, %v1276
        %v1278 = vpop.f32.mrf.mxu0
        %1279 = vmatprep.mubr.f32.mxu0 0.0
        %1280 = vmatmul.mubr.f32.gmra.mxu0 %v958
        %v1281 = vpop.f32.mrf.mxu0
        %v1282 = vadd.f32 %v1208, %v1281
        %v1283 = vpop.f32.mrf.mxu0
        %1284 = vmatprep.mubr.f32.mxu0 0.0
        %1285 = vmatmul.mubr.f32.gmra.mxu0 %v959
        %v1286 = vpop.f32.mrf.mxu0
        %v1287 = vadd.f32 %v1208, %v1286
        %v1288 = vpop.f32.mrf.mxu0
        %1289 = vmatprep.mubr.f32.mxu0 0.0
        %1290 = vmatmul.mubr.f32.gmra.mxu0 %v960
        %v1291 = vpop.f32.mrf.mxu0
        %v1292 = vadd.f32 %v1208, %v1291
        %v1293 = vpop.f32.mrf.mxu0
        %1294 = vmatprep.mubr.f32.mxu0 0.0
        %1295 = vmatmul.mubr.f32.gmra.mxu0 %v961
        %v1296 = vpop.f32.mrf.mxu0
        %v1297 = vadd.f32 %v1208, %v1296
        %v1298 = vpop.f32.mrf.mxu0
        %1299 = vmatprep.mubr.f32.mxu0 0.0
        %1300 = vmatmul.mubr.f32.gmra.mxu0 %v962
        %v1301 = vpop.f32.mrf.mxu0
        %v1302 = vadd.f32 %v1208, %v1301
        %v1303 = vpop.f32.mrf.mxu0
        %1304 = vmatprep.mubr.f32.mxu0 0.0
        %1305 = vmatmul.mubr.f32.gmra.mxu0 %v963
        %v1306 = vpop.f32.mrf.mxu0
        %v1307 = vadd.f32 %v1208, %v1306
        %v1308 = vpop.f32.mrf.mxu0
        %1309 = vmatprep.mubr.f32.mxu0 0.0
        %1310 = vmatmul.mubr.f32.gmra.mxu0 %v964
        %v1311 = vpop.f32.mrf.mxu0
        %v1312 = vadd.f32 %v1208, %v1311
        %v1313 = vpop.f32.mrf.mxu0
        %1314 = vmatprep.mubr.f32.mxu0 0.0
        %1315 = vmatmul.mubr.f32.gmra.mxu0 %v965
        %v1316 = vpop.f32.mrf.mxu0
        %v1317 = vadd.f32 %v1208, %v1316
        %v1318 = vpop.f32.mrf.mxu0
        %1319 = vmatprep.mubr.f32.mxu0 0.0
        %1320 = vmatmul.mubr.f32.gmra.mxu0 %v966
        %v1321 = vpop.f32.mrf.mxu0
        %v1322 = vadd.f32 %v1208, %v1321
        %v1323 = vpop.f32.mrf.mxu0
        %1324 = vmatprep.mubr.f32.mxu0 0.0
        %1325 = vmatmul.mubr.f32.gmra.mxu0 %v967
        %v1326 = vpop.f32.mrf.mxu0
        %v1327 = vadd.f32 %v1208, %v1326
        %v1328 = vpop.f32.mrf.mxu0
        %1329 = vmatprep.mubr.f32.mxu0 0.0
        %1330 = vmatmul.mubr.f32.gmra.mxu0 %v968
        %v1331 = vpop.f32.mrf.mxu0
        %v1332 = vadd.f32 %v1208, %v1331
        %v1333 = vpop.f32.mrf.mxu0
        %1334 = vmatprep.mubr.f32.mxu0 0.0
        %1335 = vmatmul.mubr.f32.gmra.mxu0 %v969
        %v1336 = vpop.f32.mrf.mxu0
        %v1337 = vadd.f32 %v1208, %v1336
        %v1338 = vpop.f32.mrf.mxu0
        %1339 = vmatprep.mubr.f32.mxu0 0.0
        %1340 = vmatmul.mubr.f32.gmra.mxu0 %v970
        %v1341 = vpop.f32.mrf.mxu0
        %v1342 = vadd.f32 %v1208, %v1341
        %v1343 = vpop.f32.mrf.mxu0
        %1344 = vmatprep.mubr.f32.mxu0 0.0
        %1345 = vmatmul.mubr.f32.gmra.mxu0 %v971
        %v1346 = vpop.f32.mrf.mxu0
        %v1347 = vadd.f32 %v1208, %v1346
        %v1348 = vpop.f32.mrf.mxu0
        %1349 = vmatprep.mubr.f32.mxu0 0.0
        %1350 = vmatmul.mubr.f32.gmra.mxu0 %v972
        %v1351 = vpop.f32.mrf.mxu0
        %v1352 = vadd.f32 %v1208, %v1351
        %v1353 = vpop.f32.mrf.mxu0
        %1354 = vdwg.mxu0
        %v1355 = vld [vmem:[#allocation2] sm:$0xff]
        %v1356 = vld [vmem:[#allocation2 + $0x8] sm:$0xff]
        %v1357 = vld [vmem:[#allocation2 + $0x10] sm:$0xff]
        %v1358 = vld [vmem:[#allocation2 + $0x18] sm:$0xff]
        %v1359 = vld [vmem:[#allocation2 + $0x20] sm:$0xff]
        %v1360 = vld [vmem:[#allocation2 + $0x28] sm:$0xff]
        %v1361 = vld [vmem:[#allocation2 + $0x30] sm:$0xff]
        %v1362 = vld [vmem:[#allocation2 + $0x38] sm:$0xff]
        %v1363 = vld [vmem:[#allocation2 + $0x40] sm:$0xff]
        %v1364 = vld [vmem:[#allocation2 + $0x48] sm:$0xff]
        %v1365 = vld [vmem:[#allocation2 + $0x50] sm:$0xff]
        %v1366 = vld [vmem:[#allocation2 + $0x58] sm:$0xff]
        %v1367 = vld [vmem:[#allocation2 + $0x60] sm:$0xff]
        %v1368 = vld [vmem:[#allocation2 + $0x68] sm:$0xff]
        %v1369 = vld [vmem:[#allocation2 + $0x70] sm:$0xff]
        %v1370 = vld [vmem:[#allocation2 + $0x78] sm:$0xff]
        %v1371 = vld [vmem:[#allocation2 + $0x80] sm:$0xff]
        %v1372 = vld [vmem:[#allocation2 + $0x88] sm:$0xff]
        %v1373 = vld [vmem:[#allocation2 + $0x90] sm:$0xff]
        %v1374 = vld [vmem:[#allocation2 + $0x98] sm:$0xff]
        %v1375 = vld [vmem:[#allocation2 + $0xa0] sm:$0xff]
        %v1376 = vld [vmem:[#allocation2 + $0xa8] sm:$0xff]
        %v1377 = vld [vmem:[#allocation2 + $0xb0] sm:$0xff]
        %v1378 = vld [vmem:[#allocation2 + $0xb8] sm:$0xff]
        %v1379 = vld [vmem:[#allocation2 + $0xc0] sm:$0xff]
        %v1380 = vld [vmem:[#allocation2 + $0xc8] sm:$0xff]
        %v1381 = vld [vmem:[#allocation2 + $0xd0] sm:$0xff]
        %v1382 = vld [vmem:[#allocation2 + $0xd8] sm:$0xff]
        %v1383 = vld [vmem:[#allocation2 + $0xe0] sm:$0xff]
        %v1384 = vld [vmem:[#allocation2 + $0xe8] sm:$0xff]
        %v1385 = vld [vmem:[#allocation2 + $0xf0] sm:$0xff]
        %v1386 = vld [vmem:[#allocation2 + $0xf8] sm:$0xff]
        %1387 = vmatprep.subr.mxu0 0.0
        %1388 = vmatpush1.xpose.msra.mxu0 %v1184
        %1389 = vmatprep.subr.mxu0 0.0
        %1390 = vmatpush1.xpose.msra.mxu0 %v1179
        %1391 = vmatprep.subr.mxu0 0.0
        %1392 = vmatpush1.xpose.msra.mxu0 %v1174
        %1393 = vmatprep.subr.mxu0 0.0
        %1394 = vmatpush1.xpose.msra.mxu0 %v1169
        %1395 = vmatprep.subr.mxu0 0.0
        %1396 = vmatpush1.xpose.msra.mxu0 %v1164
        %1397 = vmatprep.subr.mxu0 0.0
        %1398 = vmatpush1.xpose.msra.mxu0 %v1159
        %1399 = vmatprep.subr.mxu0 0.0
        %1400 = vmatpush1.xpose.msra.mxu0 %v1154
        %1401 = vmatprep.subr.mxu0 0.0
        %1402 = vmatpush1.xpose.msra.mxu0 %v1149
        %1403 = vmatprep.subr.mxu0 0.0
        %1404 = vmatpush1.xpose.msra.mxu0 %v1144
        %1405 = vmatprep.subr.mxu0 0.0
        %1406 = vmatpush1.xpose.msra.mxu0 %v1139
        %1407 = vmatprep.subr.mxu0 0.0
        %1408 = vmatpush1.xpose.msra.mxu0 %v1134
        %1409 = vmatprep.subr.mxu0 0.0
        %1410 = vmatpush1.xpose.msra.mxu0 %v1129
        %1411 = vmatprep.subr.mxu0 0.0
        %1412 = vmatpush1.xpose.msra.mxu0 %v1124
        %1413 = vmatprep.subr.mxu0 0.0
        %1414 = vmatpush1.xpose.msra.mxu0 %v1119
        %1415 = vmatprep.subr.mxu0 0.0
        %1416 = vmatpush1.xpose.msra.mxu0 %v1114
        %1417 = vmatprep.subr.mxu0 0.0
        %1418 = vmatpush1.xpose.msra.mxu0 %v1109
        %1419 = vmatprep.subr.mxu0 0.0
        %1420 = vmatpush2.xpose.msra.mxu0 0.0
        %1421 = vmatprep.subr.mxu0 0.0
        %1422 = vmatpush2.xpose.msra.mxu0 0.0
        %1423 = vmatprep.subr.mxu0 0.0
        %1424 = vmatpush2.xpose.msra.mxu0 0.0
        %1425 = vmatprep.subr.mxu0 0.0
        %1426 = vmatpush2.xpose.msra.mxu0 0.0
        %1427 = vmatprep.subr.mxu0 0.0
        %1428 = vmatpush2.xpose.msra.mxu0 0.0
        %1429 = vmatprep.subr.mxu0 0.0
        %1430 = vmatpush2.xpose.msra.mxu0 0.0
        %1431 = vmatprep.subr.mxu0 0.0
        %1432 = vmatpush2.xpose.msra.mxu0 0.0
        %1433 = vmatprep.subr.mxu0 0.0
        %1434 = vmatpush2.xpose.msra.mxu0 0.0
        %1435 = vmatprep.subr.mxu0 0.0
        %1436 = vmatpush2.xpose.msra.mxu0 0.0
        %1437 = vmatprep.subr.mxu0 0.0
        %1438 = vmatpush2.xpose.msra.mxu0 0.0
        %1439 = vmatprep.subr.mxu0 0.0
        %1440 = vmatpush2.xpose.msra.mxu0 0.0
        %1441 = vmatprep.subr.mxu0 0.0
        %1442 = vmatpush2.xpose.msra.mxu0 0.0
        %1443 = vmatprep.subr.mxu0 0.0
        %1444 = vmatpush2.xpose.msra.mxu0 0.0
        %1445 = vmatprep.subr.mxu0 0.0
        %1446 = vmatpush2.xpose.msra.mxu0 0.0
        %1447 = vmatprep.subr.mxu0 0.0
        %1448 = vmatpush2.xpose.msra.mxu0 0.0
        %1449 = vmatprep.subr.mxu0 0.0
        %1450 = vmatpush2.xpose.msra.mxu0 0.0
        %1451 = vmatprep.mubr.f32.mxu0 0.0
        %1452 = vmatmul.mubr.f32.gmra.mxu0 %v1355
        %v1453 = vpop.f32.mrf.mxu0
        %v1454 = vadd.f32 0.0, %v1453
        %v1455 = vpop.f32.mrf.mxu0
        %1456 = vmatprep.mubr.f32.mxu0 0.0
        %1457 = vmatmul.mubr.f32.gmra.mxu0 %v1356
        %v1458 = vpop.f32.mrf.mxu0
        %v1459 = vadd.f32 0.0, %v1458
        %v1460 = vpop.f32.mrf.mxu0
        %1461 = vmatprep.mubr.f32.mxu0 0.0
        %1462 = vmatmul.mubr.f32.gmra.mxu0 %v1357
        %v1463 = vpop.f32.mrf.mxu0
        %v1464 = vadd.f32 0.0, %v1463
        %v1465 = vpop.f32.mrf.mxu0
        %1466 = vmatprep.mubr.f32.mxu0 0.0
        %1467 = vmatmul.mubr.f32.gmra.mxu0 %v1358
        %v1468 = vpop.f32.mrf.mxu0
        %v1469 = vadd.f32 0.0, %v1468
        %v1470 = vpop.f32.mrf.mxu0
        %1471 = vmatprep.mubr.f32.mxu0 0.0
        %1472 = vmatmul.mubr.f32.gmra.mxu0 %v1359
        %v1473 = vpop.f32.mrf.mxu0
        %v1474 = vadd.f32 0.0, %v1473
        %v1475 = vpop.f32.mrf.mxu0
        %1476 = vmatprep.mubr.f32.mxu0 0.0
        %1477 = vmatmul.mubr.f32.gmra.mxu0 %v1360
        %v1478 = vpop.f32.mrf.mxu0
        %v1479 = vadd.f32 0.0, %v1478
        %v1480 = vpop.f32.mrf.mxu0
        %1481 = vmatprep.mubr.f32.mxu0 0.0
        %1482 = vmatmul.mubr.f32.gmra.mxu0 %v1361
        %v1483 = vpop.f32.mrf.mxu0
        %v1484 = vadd.f32 0.0, %v1483
        %v1485 = vpop.f32.mrf.mxu0
        %1486 = vmatprep.mubr.f32.mxu0 0.0
        %1487 = vmatmul.mubr.f32.gmra.mxu0 %v1362
        %v1488 = vpop.f32.mrf.mxu0
        %v1489 = vadd.f32 0.0, %v1488
        %v1490 = vpop.f32.mrf.mxu0
        %1491 = vmatprep.mubr.f32.mxu0 0.0
        %1492 = vmatmul.mubr.f32.gmra.mxu0 %v1363
        %v1493 = vpop.f32.mrf.mxu0
        %v1494 = vadd.f32 0.0, %v1493
        %v1495 = vpop.f32.mrf.mxu0
        %1496 = vmatprep.mubr.f32.mxu0 0.0
        %1497 = vmatmul.mubr.f32.gmra.mxu0 %v1364
        %v1498 = vpop.f32.mrf.mxu0
        %v1499 = vadd.f32 0.0, %v1498
        %v1500 = vpop.f32.mrf.mxu0
        %1501 = vmatprep.mubr.f32.mxu0 0.0
        %1502 = vmatmul.mubr.f32.gmra.mxu0 %v1365
        %v1503 = vpop.f32.mrf.mxu0
        %v1504 = vadd.f32 0.0, %v1503
        %v1505 = vpop.f32.mrf.mxu0
        %1506 = vmatprep.mubr.f32.mxu0 0.0
        %1507 = vmatmul.mubr.f32.gmra.mxu0 %v1366
        %v1508 = vpop.f32.mrf.mxu0
        %v1509 = vadd.f32 0.0, %v1508
        %v1510 = vpop.f32.mrf.mxu0
        %1511 = vmatprep.mubr.f32.mxu0 0.0
        %1512 = vmatmul.mubr.f32.gmra.mxu0 %v1367
        %v1513 = vpop.f32.mrf.mxu0
        %v1514 = vadd.f32 0.0, %v1513
        %v1515 = vpop.f32.mrf.mxu0
        %1516 = vmatprep.mubr.f32.mxu0 0.0
        %1517 = vmatmul.mubr.f32.gmra.mxu0 %v1368
        %v1518 = vpop.f32.mrf.mxu0
        %v1519 = vadd.f32 0.0, %v1518
        %v1520 = vpop.f32.mrf.mxu0
        %1521 = vmatprep.mubr.f32.mxu0 0.0
        %1522 = vmatmul.mubr.f32.gmra.mxu0 %v1369
        %v1523 = vpop.f32.mrf.mxu0
        %v1524 = vadd.f32 0.0, %v1523
        %v1525 = vpop.f32.mrf.mxu0
        %1526 = vmatprep.mubr.f32.mxu0 0.0
        %1527 = vmatmul.mubr.f32.gmra.mxu0 %v1370
        %v1528 = vpop.f32.mrf.mxu0
        %v1529 = vadd.f32 0.0, %v1528
        %v1530 = vpop.f32.mrf.mxu0
        %1531 = vmatprep.mubr.f32.mxu0 0.0
        %1532 = vmatmul.mubr.f32.gmra.mxu0 %v1371
        %v1533 = vpop.f32.mrf.mxu0
        %v1534 = vadd.f32 0.0, %v1533
        %v1535 = vpop.f32.mrf.mxu0
        %1536 = vmatprep.mubr.f32.mxu0 0.0
        %1537 = vmatmul.mubr.f32.gmra.mxu0 %v1372
        %v1538 = vpop.f32.mrf.mxu0
        %v1539 = vadd.f32 0.0, %v1538
        %v1540 = vpop.f32.mrf.mxu0
        %1541 = vmatprep.mubr.f32.mxu0 0.0
        %1542 = vmatmul.mubr.f32.gmra.mxu0 %v1373
        %v1543 = vpop.f32.mrf.mxu0
        %v1544 = vadd.f32 0.0, %v1543
        %v1545 = vpop.f32.mrf.mxu0
        %1546 = vmatprep.mubr.f32.mxu0 0.0
        %1547 = vmatmul.mubr.f32.gmra.mxu0 %v1374
        %v1548 = vpop.f32.mrf.mxu0
        %v1549 = vadd.f32 0.0, %v1548
        %v1550 = vpop.f32.mrf.mxu0
        %1551 = vmatprep.mubr.f32.mxu0 0.0
        %1552 = vmatmul.mubr.f32.gmra.mxu0 %v1375
        %v1553 = vpop.f32.mrf.mxu0
        %v1554 = vadd.f32 0.0, %v1553
        %v1555 = vpop.f32.mrf.mxu0
        %1556 = vmatprep.mubr.f32.mxu0 0.0
        %1557 = vmatmul.mubr.f32.gmra.mxu0 %v1376
        %v1558 = vpop.f32.mrf.mxu0
        %v1559 = vadd.f32 0.0, %v1558
        %v1560 = vpop.f32.mrf.mxu0
        %1561 = vmatprep.mubr.f32.mxu0 0.0
        %1562 = vmatmul.mubr.f32.gmra.mxu0 %v1377
        %v1563 = vpop.f32.mrf.mxu0
        %v1564 = vadd.f32 0.0, %v1563
        %v1565 = vpop.f32.mrf.mxu0
        %1566 = vmatprep.mubr.f32.mxu0 0.0
        %1567 = vmatmul.mubr.f32.gmra.mxu0 %v1378
        %v1568 = vpop.f32.mrf.mxu0
        %v1569 = vadd.f32 0.0, %v1568
        %v1570 = vpop.f32.mrf.mxu0
        %1571 = vmatprep.mubr.f32.mxu0 0.0
        %1572 = vmatmul.mubr.f32.gmra.mxu0 %v1379
        %v1573 = vpop.f32.mrf.mxu0
        %v1574 = vadd.f32 0.0, %v1573
        %v1575 = vpop.f32.mrf.mxu0
        %1576 = vmatprep.mubr.f32.mxu0 0.0
        %1577 = vmatmul.mubr.f32.gmra.mxu0 %v1380
        %v1578 = vpop.f32.mrf.mxu0
        %v1579 = vadd.f32 0.0, %v1578
        %v1580 = vpop.f32.mrf.mxu0
        %1581 = vmatprep.mubr.f32.mxu0 0.0
        %1582 = vmatmul.mubr.f32.gmra.mxu0 %v1381
        %v1583 = vpop.f32.mrf.mxu0
        %v1584 = vadd.f32 0.0, %v1583
        %v1585 = vpop.f32.mrf.mxu0
        %1586 = vmatprep.mubr.f32.mxu0 0.0
        %1587 = vmatmul.mubr.f32.gmra.mxu0 %v1382
        %v1588 = vpop.f32.mrf.mxu0
        %v1589 = vadd.f32 0.0, %v1588
        %v1590 = vpop.f32.mrf.mxu0
        %1591 = vmatprep.mubr.f32.mxu0 0.0
        %1592 = vmatmul.mubr.f32.gmra.mxu0 %v1383
        %v1593 = vpop.f32.mrf.mxu0
        %v1594 = vadd.f32 0.0, %v1593
        %v1595 = vpop.f32.mrf.mxu0
        %1596 = vmatprep.mubr.f32.mxu0 0.0
        %1597 = vmatmul.mubr.f32.gmra.mxu0 %v1384
        %v1598 = vpop.f32.mrf.mxu0
        %v1599 = vadd.f32 0.0, %v1598
        %v1600 = vpop.f32.mrf.mxu0
        %1601 = vmatprep.mubr.f32.mxu0 0.0
        %1602 = vmatmul.mubr.f32.gmra.mxu0 %v1385
        %v1603 = vpop.f32.mrf.mxu0
        %v1604 = vadd.f32 0.0, %v1603
        %v1605 = vpop.f32.mrf.mxu0
        %1606 = vmatprep.mubr.f32.mxu0 0.0
        %1607 = vmatmul.mubr.f32.gmra.mxu0 %v1386
        %v1608 = vpop.f32.mrf.mxu0
        %v1609 = vadd.f32 0.0, %v1608
        %v1610 = vpop.f32.mrf.mxu0
        %1611 = vdwg.mxu0
        %v1612 = vmax.f32 %v1454, %v1474
        %v1613 = vmax.f32 %v1459, %v1479
        %v1614 = vmax.f32 %v1464, %v1484
        %v1615 = vmax.f32 %v1469, %v1489
        %v1616 = vmax.f32 %v1612, %v1494
        %v1617 = vmax.f32 %v1613, %v1499
        %v1618 = vmax.f32 %v1614, %v1504
        %v1619 = vmax.f32 %v1615, %v1509
        %v1620 = vmax.f32 %v1616, %v1514
        %v1621 = vmax.f32 %v1617, %v1519
        %v1622 = vmax.f32 %v1618, %v1524
        %v1623 = vmax.f32 %v1619, %v1529
        %v1624 = vmax.f32 %v1620, %v1534
        %v1625 = vmax.f32 %v1621, %v1539
        %v1626 = vmax.f32 %v1622, %v1544
        %v1627 = vmax.f32 %v1623, %v1549
        %v1628 = vmax.f32 %v1624, %v1554
        %v1629 = vmax.f32 %v1625, %v1559
        %v1630 = vmax.f32 %v1626, %v1564
        %v1631 = vmax.f32 %v1627, %v1569
        %v1632 = vmax.f32 %v1628, %v1574
        %v1633 = vmax.f32 %v1629, %v1579
        %v1634 = vmax.f32 %v1630, %v1584
        %v1635 = vmax.f32 %v1631, %v1589
        %v1636 = vmax.f32 %v1632, %v1594
        %v1637 = vmax.f32 %v1633, %v1599
        %v1638 = vmax.f32 %v1634, %v1604
        %v1639 = vmax.f32 %v1635, %v1609
        %v1640 = vmax.f32 %v1636, %v1637
        %v1641 = vmax.f32 %v1638, %v1639
        %v1642 = vmax.f32 %v1640, %v1641
        %v1643 = vrot.slane %v1642, 4
        %v1644 = vmax.f32 %v1642, %v1643
        %v1645 = vrot.slane %v1644, 2
        %v1646 = vmax.f32 %v1644, %v1645
        %v1647 = vrot.slane %v1646, 1
        %v1648 = vmax.f32 %v1646, %v1647
        %v1649 = vsub.f32 %v1454, %v1648
        %v1650 = vsub.f32 %v1459, %v1648
        %v1651 = vsub.f32 %v1464, %v1648
        %v1652 = vsub.f32 %v1469, %v1648
        %v1653 = vsub.f32 %v1474, %v1648
        %v1654 = vsub.f32 %v1479, %v1648
        %v1655 = vsub.f32 %v1484, %v1648
        %v1656 = vsub.f32 %v1489, %v1648
        %v1657 = vsub.f32 %v1494, %v1648
        %v1658 = vsub.f32 %v1499, %v1648
        %v1659 = vsub.f32 %v1504, %v1648
        %v1660 = vsub.f32 %v1509, %v1648
        %v1661 = vsub.f32 %v1514, %v1648
        %v1662 = vsub.f32 %v1519, %v1648
        %v1663 = vsub.f32 %v1524, %v1648
        %v1664 = vsub.f32 %v1529, %v1648
        %v1665 = vsub.f32 %v1534, %v1648
        %v1666 = vsub.f32 %v1539, %v1648
        %v1667 = vsub.f32 %v1544, %v1648
        %v1668 = vsub.f32 %v1549, %v1648
        %v1669 = vsub.f32 %v1554, %v1648
        %v1670 = vsub.f32 %v1559, %v1648
        %v1671 = vsub.f32 %v1564, %v1648
        %v1672 = vsub.f32 %v1569, %v1648
        %v1673 = vsub.f32 %v1574, %v1648
        %v1674 = vsub.f32 %v1579, %v1648
        %v1675 = vsub.f32 %v1584, %v1648
        %v1676 = vsub.f32 %v1589, %v1648
        %v1677 = vsub.f32 %v1594, %v1648
        %v1678 = vsub.f32 %v1599, %v1648
        %v1679 = vsub.f32 %v1604, %v1648
        %v1680 = vsub.f32 %v1609, %v1648
        %v1681 = vmul.f32 %v1649, 1.442695
        %v1682 = vpow.pop %v1681
        %v1683 = vmul.f32 %v1650, 1.442695
        %v1684 = vpow.pop %v1683
        %v1685 = vmul.f32 %v1651, 1.442695
        %v1686 = vpow.pop %v1685
        %v1687 = vmul.f32 %v1652, 1.442695
        %v1688 = vpow.pop %v1687
        %v1689 = vmul.f32 %v1653, 1.442695
        %v1690 = vpow.pop %v1689
        %v1691 = vmul.f32 %v1654, 1.442695
        %v1692 = vpow.pop %v1691
        %v1693 = vmul.f32 %v1655, 1.442695
        %v1694 = vpow.pop %v1693
        %v1695 = vmul.f32 %v1656, 1.442695
        %v1696 = vpow.pop %v1695
        %v1697 = vmul.f32 %v1657, 1.442695
        %v1698 = vpow.pop %v1697
        %v1699 = vmul.f32 %v1658, 1.442695
        %v1700 = vpow.pop %v1699
        %v1701 = vmul.f32 %v1659, 1.442695
        %v1702 = vpow.pop %v1701
        %v1703 = vmul.f32 %v1660, 1.442695
        %v1704 = vpow.pop %v1703
        %v1705 = vmul.f32 %v1661, 1.442695
        %v1706 = vpow.pop %v1705
        %v1707 = vmul.f32 %v1662, 1.442695
        %v1708 = vpow.pop %v1707
        %v1709 = vmul.f32 %v1663, 1.442695
        %v1710 = vpow.pop %v1709
        %v1711 = vmul.f32 %v1664, 1.442695
        %v1712 = vpow.pop %v1711
        %v1713 = vmul.f32 %v1665, 1.442695
        %v1714 = vpow.pop %v1713
        %v1715 = vmul.f32 %v1666, 1.442695
        %v1716 = vpow.pop %v1715
        %v1717 = vmul.f32 %v1667, 1.442695
        %v1718 = vpow.pop %v1717
        %v1719 = vmul.f32 %v1668, 1.442695
        %v1720 = vpow.pop %v1719
        %v1721 = vmul.f32 %v1669, 1.442695
        %v1722 = vpow.pop %v1721
        %v1723 = vmul.f32 %v1670, 1.442695
        %v1724 = vpow.pop %v1723
        %v1725 = vmul.f32 %v1671, 1.442695
        %v1726 = vpow.pop %v1725
        %v1727 = vmul.f32 %v1672, 1.442695
        %v1728 = vpow.pop %v1727
        %v1729 = vmul.f32 %v1673, 1.442695
        %v1730 = vpow.pop %v1729
        %v1731 = vmul.f32 %v1674, 1.442695
        %v1732 = vpow.pop %v1731
        %v1733 = vmul.f32 %v1675, 1.442695
        %v1734 = vpow.pop %v1733
        %v1735 = vmul.f32 %v1676, 1.442695
        %v1736 = vpow.pop %v1735
        %v1737 = vmul.f32 %v1677, 1.442695
        %v1738 = vpow.pop %v1737
        %v1739 = vmul.f32 %v1678, 1.442695
        %v1740 = vpow.pop %v1739
        %v1741 = vmul.f32 %v1679, 1.442695
        %v1742 = vpow.pop %v1741
        %v1743 = vmul.f32 %v1680, 1.442695
        %v1744 = vpow.pop %v1743
        %v1745 = vadd.f32 %v1682, %v1684
        %v1746 = vadd.f32 %v1745, %v1686
        %v1747 = vadd.f32 %v1746, %v1688
        %v1748 = vadd.f32 %v1747, %v1690
        %v1749 = vadd.f32 %v1748, %v1692
        %v1750 = vadd.f32 %v1749, %v1694
        %v1751 = vadd.f32 %v1750, %v1696
        %v1752 = vadd.f32 %v1751, %v1698
        %v1753 = vadd.f32 %v1752, %v1700
        %v1754 = vadd.f32 %v1753, %v1702
        %v1755 = vadd.f32 %v1754, %v1704
        %v1756 = vadd.f32 %v1755, %v1706
        %v1757 = vadd.f32 %v1756, %v1708
        %v1758 = vadd.f32 %v1757, %v1710
        %v1759 = vadd.f32 %v1758, %v1712
        %v1760 = vadd.f32 %v1759, %v1714
        %v1761 = vadd.f32 %v1760, %v1716
        %v1762 = vadd.f32 %v1761, %v1718
        %v1763 = vadd.f32 %v1762, %v1720
        %v1764 = vadd.f32 %v1763, %v1722
        %v1765 = vadd.f32 %v1764, %v1724
        %v1766 = vadd.f32 %v1765, %v1726
        %v1767 = vadd.f32 %v1766, %v1728
        %v1768 = vadd.f32 %v1767, %v1730
        %v1769 = vadd.f32 %v1768, %v1732
        %v1770 = vadd.f32 %v1769, %v1734
        %v1771 = vadd.f32 %v1770, %v1736
        %v1772 = vadd.f32 %v1771, %v1738
        %v1773 = vadd.f32 %v1772, %v1740
        %v1774 = vadd.f32 %v1773, %v1742
        %v1775 = vadd.f32 %v1774, %v1744
        %v1776 = vrot.slane %v1775, 4
        %v1777 = vadd.f32 %v1775, %v1776
        %v1778 = vrot.slane %v1777, 2
        %v1779 = vadd.f32 %v1777, %v1778
        %v1780 = vrot.slane %v1779, 1
        %v1781 = vadd.f32 %v1779, %v1780
        %v1782 = vrcp.pop %v1781
        %v1783 = vmul.f32 %v1682, %v1782
        %v1784 = vmul.f32 %v1684, %v1782
        %v1785 = vmul.f32 %v1686, %v1782
        %v1786 = vmul.f32 %v1688, %v1782
        %v1787 = vmul.f32 %v1690, %v1782
        %v1788 = vmul.f32 %v1692, %v1782
        %v1789 = vmul.f32 %v1694, %v1782
        %v1790 = vmul.f32 %v1696, %v1782
        %v1791 = vmul.f32 %v1698, %v1782
        %v1792 = vmul.f32 %v1700, %v1782
        %v1793 = vmul.f32 %v1702, %v1782
        %v1794 = vmul.f32 %v1704, %v1782
        %v1795 = vmul.f32 %v1706, %v1782
        %v1796 = vmul.f32 %v1708, %v1782
        %v1797 = vmul.f32 %v1710, %v1782
        %v1798 = vmul.f32 %v1712, %v1782
        %v1799 = vmul.f32 %v1714, %v1782
        %v1800 = vmul.f32 %v1716, %v1782
        %v1801 = vmul.f32 %v1718, %v1782
        %v1802 = vmul.f32 %v1720, %v1782
        %v1803 = vmul.f32 %v1722, %v1782
        %v1804 = vmul.f32 %v1724, %v1782
        %v1805 = vmul.f32 %v1726, %v1782
        %v1806 = vmul.f32 %v1728, %v1782
        %v1807 = vmul.f32 %v1730, %v1782
        %v1808 = vmul.f32 %v1732, %v1782
        %v1809 = vmul.f32 %v1734, %v1782
        %v1810 = vmul.f32 %v1736, %v1782
        %v1811 = vmul.f32 %v1738, %v1782
        %v1812 = vmul.f32 %v1740, %v1782
        %v1813 = vmul.f32 %v1742, %v1782
        %v1814 = vmul.f32 %v1744, %v1782
        %v1815 = vld [vmem:[%s412] sm:$0xff]
        %v1816 = vld [vmem:[%s412 + $0x8] sm:$0xff]
        %v1817 = vld [vmem:[%s412 + $0x10] sm:$0xff]
        %v1818 = vld [vmem:[%s412 + $0x18] sm:$0xff]
        %v1819 = vld [vmem:[%s412 + $0x20] sm:$0xff]
        %v1820 = vld [vmem:[%s412 + $0x28] sm:$0xff]
        %v1821 = vld [vmem:[%s412 + $0x30] sm:$0xff]
        %v1822 = vld [vmem:[%s412 + $0x38] sm:$0xff]
        %v1823 = vld [vmem:[%s412 + $0x40] sm:$0xff]
        %v1824 = vld [vmem:[%s412 + $0x48] sm:$0xff]
        %v1825 = vld [vmem:[%s412 + $0x50] sm:$0xff]
        %v1826 = vld [vmem:[%s412 + $0x58] sm:$0xff]
        %v1827 = vld [vmem:[%s412 + $0x60] sm:$0xff]
        %v1828 = vld [vmem:[%s412 + $0x68] sm:$0xff]
        %v1829 = vld [vmem:[%s412 + $0x70] sm:$0xff]
        %v1830 = vld [vmem:[%s412 + $0x78] sm:$0xff]
        %v1831 = vld [vmem:[%s412 + $0x80] sm:$0xff]
        %v1832 = vld [vmem:[%s412 + $0x88] sm:$0xff]
        %v1833 = vld [vmem:[%s412 + $0x90] sm:$0xff]
        %v1834 = vld [vmem:[%s412 + $0x98] sm:$0xff]
        %v1835 = vld [vmem:[%s412 + $0xa0] sm:$0xff]
        %v1836 = vld [vmem:[%s412 + $0xa8] sm:$0xff]
        %v1837 = vld [vmem:[%s412 + $0xb0] sm:$0xff]
        %v1838 = vld [vmem:[%s412 + $0xb8] sm:$0xff]
        %v1839 = vld [vmem:[%s412 + $0xc0] sm:$0xff]
        %v1840 = vld [vmem:[%s412 + $0xc8] sm:$0xff]
        %v1841 = vld [vmem:[%s412 + $0xd0] sm:$0xff]
        %v1842 = vld [vmem:[%s412 + $0xd8] sm:$0xff]
        %v1843 = vld [vmem:[%s412 + $0xe0] sm:$0xff]
        %v1844 = vld [vmem:[%s412 + $0xe8] sm:$0xff]
        %v1845 = vld [vmem:[%s412 + $0xf0] sm:$0xff]
        %v1846 = vld [vmem:[%s412 + $0xf8] sm:$0xff]
        %1847 = vmatprep.subr.mxu0 0.0
        %1848 = vmatpush1.msra.mxu0 %v1352
        %1849 = vmatprep.subr.mxu0 0.0
        %1850 = vmatpush1.msra.mxu0 %v1347
        %1851 = vmatprep.subr.mxu0 0.0
        %1852 = vmatpush1.msra.mxu0 %v1342
        %1853 = vmatprep.subr.mxu0 0.0
        %1854 = vmatpush1.msra.mxu0 %v1337
        %1855 = vmatprep.subr.mxu0 0.0
        %1856 = vmatpush1.msra.mxu0 %v1332
        %1857 = vmatprep.subr.mxu0 0.0
        %1858 = vmatpush1.msra.mxu0 %v1327
        %1859 = vmatprep.subr.mxu0 0.0
        %1860 = vmatpush1.msra.mxu0 %v1322
        %1861 = vmatprep.subr.mxu0 0.0
        %1862 = vmatpush1.msra.mxu0 %v1317
        %1863 = vmatprep.subr.mxu0 0.0
        %1864 = vmatpush1.msra.mxu0 %v1312
        %1865 = vmatprep.subr.mxu0 0.0
        %1866 = vmatpush1.msra.mxu0 %v1307
        %1867 = vmatprep.subr.mxu0 0.0
        %1868 = vmatpush1.msra.mxu0 %v1302
        %1869 = vmatprep.subr.mxu0 0.0
        %1870 = vmatpush1.msra.mxu0 %v1297
        %1871 = vmatprep.subr.mxu0 0.0
        %1872 = vmatpush1.msra.mxu0 %v1292
        %1873 = vmatprep.subr.mxu0 0.0
        %1874 = vmatpush1.msra.mxu0 %v1287
        %1875 = vmatprep.subr.mxu0 0.0
        %1876 = vmatpush1.msra.mxu0 %v1282
        %1877 = vmatprep.subr.mxu0 0.0
        %1878 = vmatpush1.msra.mxu0 %v1277
        %1879 = vmatprep.subr.mxu0 0.0
        %1880 = vmatpush2.msra.mxu0 0.0
        %1881 = vmatprep.subr.mxu0 0.0
        %1882 = vmatpush2.msra.mxu0 0.0
        %1883 = vmatprep.subr.mxu0 0.0
        %1884 = vmatpush2.msra.mxu0 0.0
        %1885 = vmatprep.subr.mxu0 0.0
        %1886 = vmatpush2.msra.mxu0 0.0
        %1887 = vmatprep.subr.mxu0 0.0
        %1888 = vmatpush2.msra.mxu0 0.0
        %1889 = vmatprep.subr.mxu0 0.0
        %1890 = vmatpush2.msra.mxu0 0.0
        %1891 = vmatprep.subr.mxu0 0.0
        %1892 = vmatpush2.msra.mxu0 0.0
        %1893 = vmatprep.subr.mxu0 0.0
        %1894 = vmatpush2.msra.mxu0 0.0
        %1895 = vmatprep.subr.mxu0 0.0
        %1896 = vmatpush2.msra.mxu0 0.0
        %1897 = vmatprep.subr.mxu0 0.0
        %1898 = vmatpush2.msra.mxu0 0.0
        %1899 = vmatprep.subr.mxu0 0.0
        %1900 = vmatpush2.msra.mxu0 0.0
        %1901 = vmatprep.subr.mxu0 0.0
        %1902 = vmatpush2.msra.mxu0 0.0
        %1903 = vmatprep.subr.mxu0 0.0
        %1904 = vmatpush2.msra.mxu0 0.0
        %1905 = vmatprep.subr.mxu0 0.0
        %1906 = vmatpush2.msra.mxu0 0.0
        %1907 = vmatprep.subr.mxu0 0.0
        %1908 = vmatpush2.msra.mxu0 0.0
        %1909 = vmatprep.subr.mxu0 0.0
        %1910 = vmatpush2.msra.mxu0 0.0
        %1911 = vmatprep.mubr.f32.mxu0 0.0
        %1912 = vmatmul.mubr.f32.gmra.mxu0 %v1783
        %v1913 = vpop.f32.mrf.mxu0
        %v1914 = vadd.f32 0.0, %v1913
        %v1915 = vpop.f32.mrf.mxu0
        %1916 = vmatprep.mubr.f32.mxu0 0.0
        %1917 = vmatmul.mubr.f32.gmra.mxu0 %v1784
        %v1918 = vpop.f32.mrf.mxu0
        %v1919 = vadd.f32 0.0, %v1918
        %v1920 = vpop.f32.mrf.mxu0
        %1921 = vmatprep.mubr.f32.mxu0 0.0
        %1922 = vmatmul.mubr.f32.gmra.mxu0 %v1785
        %v1923 = vpop.f32.mrf.mxu0
        %v1924 = vadd.f32 0.0, %v1923
        %v1925 = vpop.f32.mrf.mxu0
        %1926 = vmatprep.mubr.f32.mxu0 0.0
        %1927 = vmatmul.mubr.f32.gmra.mxu0 %v1786
        %v1928 = vpop.f32.mrf.mxu0
        %v1929 = vadd.f32 0.0, %v1928
        %v1930 = vpop.f32.mrf.mxu0
        %1931 = vmatprep.mubr.f32.mxu0 0.0
        %1932 = vmatmul.mubr.f32.gmra.mxu0 %v1787
        %v1933 = vpop.f32.mrf.mxu0
        %v1934 = vadd.f32 0.0, %v1933
        %v1935 = vpop.f32.mrf.mxu0
        %1936 = vmatprep.mubr.f32.mxu0 0.0
        %1937 = vmatmul.mubr.f32.gmra.mxu0 %v1788
        %v1938 = vpop.f32.mrf.mxu0
        %v1939 = vadd.f32 0.0, %v1938
        %v1940 = vpop.f32.mrf.mxu0
        %1941 = vmatprep.mubr.f32.mxu0 0.0
        %1942 = vmatmul.mubr.f32.gmra.mxu0 %v1789
        %v1943 = vpop.f32.mrf.mxu0
        %v1944 = vadd.f32 0.0, %v1943
        %v1945 = vpop.f32.mrf.mxu0
        %1946 = vmatprep.mubr.f32.mxu0 0.0
        %1947 = vmatmul.mubr.f32.gmra.mxu0 %v1790
        %v1948 = vpop.f32.mrf.mxu0
        %v1949 = vadd.f32 0.0, %v1948
        %v1950 = vpop.f32.mrf.mxu0
        %1951 = vmatprep.mubr.f32.mxu0 0.0
        %1952 = vmatmul.mubr.f32.gmra.mxu0 %v1791
        %v1953 = vpop.f32.mrf.mxu0
        %v1954 = vadd.f32 0.0, %v1953
        %v1955 = vpop.f32.mrf.mxu0
        %1956 = vmatprep.mubr.f32.mxu0 0.0
        %1957 = vmatmul.mubr.f32.gmra.mxu0 %v1792
        %v1958 = vpop.f32.mrf.mxu0
        %v1959 = vadd.f32 0.0, %v1958
        %v1960 = vpop.f32.mrf.mxu0
        %1961 = vmatprep.mubr.f32.mxu0 0.0
        %1962 = vmatmul.mubr.f32.gmra.mxu0 %v1793
        %v1963 = vpop.f32.mrf.mxu0
        %v1964 = vadd.f32 0.0, %v1963
        %v1965 = vpop.f32.mrf.mxu0
        %1966 = vmatprep.mubr.f32.mxu0 0.0
        %1967 = vmatmul.mubr.f32.gmra.mxu0 %v1794
        %v1968 = vpop.f32.mrf.mxu0
        %v1969 = vadd.f32 0.0, %v1968
        %v1970 = vpop.f32.mrf.mxu0
        %1971 = vmatprep.mubr.f32.mxu0 0.0
        %1972 = vmatmul.mubr.f32.gmra.mxu0 %v1795
        %v1973 = vpop.f32.mrf.mxu0
        %v1974 = vadd.f32 0.0, %v1973
        %v1975 = vpop.f32.mrf.mxu0
        %1976 = vmatprep.mubr.f32.mxu0 0.0
        %1977 = vmatmul.mubr.f32.gmra.mxu0 %v1796
        %v1978 = vpop.f32.mrf.mxu0
        %v1979 = vadd.f32 0.0, %v1978
        %v1980 = vpop.f32.mrf.mxu0
        %1981 = vmatprep.mubr.f32.mxu0 0.0
        %1982 = vmatmul.mubr.f32.gmra.mxu0 %v1797
        %v1983 = vpop.f32.mrf.mxu0
        %v1984 = vadd.f32 0.0, %v1983
        %v1985 = vpop.f32.mrf.mxu0
        %1986 = vmatprep.mubr.f32.mxu0 0.0
        %1987 = vmatmul.mubr.f32.gmra.mxu0 %v1798
        %v1988 = vpop.f32.mrf.mxu0
        %v1989 = vadd.f32 0.0, %v1988
        %v1990 = vpop.f32.mrf.mxu0
        %1991 = vmatprep.mubr.f32.mxu0 0.0
        %1992 = vmatmul.mubr.f32.gmra.mxu0 %v1799
        %v1993 = vpop.f32.mrf.mxu0
        %v1994 = vadd.f32 0.0, %v1993
        %v1995 = vpop.f32.mrf.mxu0
        %1996 = vmatprep.mubr.f32.mxu0 0.0
        %1997 = vmatmul.mubr.f32.gmra.mxu0 %v1800
        %v1998 = vpop.f32.mrf.mxu0
        %v1999 = vadd.f32 0.0, %v1998
        %v2000 = vpop.f32.mrf.mxu0
        %2001 = vmatprep.mubr.f32.mxu0 0.0
        %2002 = vmatmul.mubr.f32.gmra.mxu0 %v1801
        %v2003 = vpop.f32.mrf.mxu0
        %v2004 = vadd.f32 0.0, %v2003
        %v2005 = vpop.f32.mrf.mxu0
        %2006 = vmatprep.mubr.f32.mxu0 0.0
        %2007 = vmatmul.mubr.f32.gmra.mxu0 %v1802
        %v2008 = vpop.f32.mrf.mxu0
        %v2009 = vadd.f32 0.0, %v2008
        %v2010 = vpop.f32.mrf.mxu0
        %2011 = vmatprep.mubr.f32.mxu0 0.0
        %2012 = vmatmul.mubr.f32.gmra.mxu0 %v1803
        %v2013 = vpop.f32.mrf.mxu0
        %v2014 = vadd.f32 0.0, %v2013
        %v2015 = vpop.f32.mrf.mxu0
        %2016 = vmatprep.mubr.f32.mxu0 0.0
        %2017 = vmatmul.mubr.f32.gmra.mxu0 %v1804
        %v2018 = vpop.f32.mrf.mxu0
        %v2019 = vadd.f32 0.0, %v2018
        %v2020 = vpop.f32.mrf.mxu0
        %2021 = vmatprep.mubr.f32.mxu0 0.0
        %2022 = vmatmul.mubr.f32.gmra.mxu0 %v1805
        %v2023 = vpop.f32.mrf.mxu0
        %v2024 = vadd.f32 0.0, %v2023
        %v2025 = vpop.f32.mrf.mxu0
        %2026 = vmatprep.mubr.f32.mxu0 0.0
        %2027 = vmatmul.mubr.f32.gmra.mxu0 %v1806
        %v2028 = vpop.f32.mrf.mxu0
        %v2029 = vadd.f32 0.0, %v2028
        %v2030 = vpop.f32.mrf.mxu0
        %2031 = vmatprep.mubr.f32.mxu0 0.0
        %2032 = vmatmul.mubr.f32.gmra.mxu0 %v1807
        %v2033 = vpop.f32.mrf.mxu0
        %v2034 = vadd.f32 0.0, %v2033
        %v2035 = vpop.f32.mrf.mxu0
        %2036 = vmatprep.mubr.f32.mxu0 0.0
        %2037 = vmatmul.mubr.f32.gmra.mxu0 %v1808
        %v2038 = vpop.f32.mrf.mxu0
        %v2039 = vadd.f32 0.0, %v2038
        %v2040 = vpop.f32.mrf.mxu0
        %2041 = vmatprep.mubr.f32.mxu0 0.0
        %2042 = vmatmul.mubr.f32.gmra.mxu0 %v1809
        %v2043 = vpop.f32.mrf.mxu0
        %v2044 = vadd.f32 0.0, %v2043
        %v2045 = vpop.f32.mrf.mxu0
        %2046 = vmatprep.mubr.f32.mxu0 0.0
        %2047 = vmatmul.mubr.f32.gmra.mxu0 %v1810
        %v2048 = vpop.f32.mrf.mxu0
        %v2049 = vadd.f32 0.0, %v2048
        %v2050 = vpop.f32.mrf.mxu0
        %2051 = vmatprep.mubr.f32.mxu0 0.0
        %2052 = vmatmul.mubr.f32.gmra.mxu0 %v1811
        %v2053 = vpop.f32.mrf.mxu0
        %v2054 = vadd.f32 0.0, %v2053
        %v2055 = vpop.f32.mrf.mxu0
        %2056 = vmatprep.mubr.f32.mxu0 0.0
        %2057 = vmatmul.mubr.f32.gmra.mxu0 %v1812
        %v2058 = vpop.f32.mrf.mxu0
        %v2059 = vadd.f32 0.0, %v2058
        %v2060 = vpop.f32.mrf.mxu0
        %2061 = vmatprep.mubr.f32.mxu0 0.0
        %2062 = vmatmul.mubr.f32.gmra.mxu0 %v1813
        %v2063 = vpop.f32.mrf.mxu0
        %v2064 = vadd.f32 0.0, %v2063
        %v2065 = vpop.f32.mrf.mxu0
        %2066 = vmatprep.mubr.f32.mxu0 0.0
        %2067 = vmatmul.mubr.f32.gmra.mxu0 %v1814
        %v2068 = vpop.f32.mrf.mxu0
        %v2069 = vadd.f32 0.0, %v2068
        %v2070 = vpop.f32.mrf.mxu0
        %2071 = vdwg.mxu0
        %v2072 = vadd.f32 %v1815, %v1914
        %v2073 = vadd.f32 %v1816, %v1919
        %v2074 = vadd.f32 %v1817, %v1924
        %v2075 = vadd.f32 %v1818, %v1929
        %v2076 = vadd.f32 %v1819, %v1934
        %v2077 = vadd.f32 %v1820, %v1939
        %v2078 = vadd.f32 %v1821, %v1944
        %v2079 = vadd.f32 %v1822, %v1949
        %v2080 = vadd.f32 %v1823, %v1954
        %v2081 = vadd.f32 %v1824, %v1959
        %v2082 = vadd.f32 %v1825, %v1964
        %v2083 = vadd.f32 %v1826, %v1969
        %v2084 = vadd.f32 %v1827, %v1974
        %v2085 = vadd.f32 %v1828, %v1979
        %v2086 = vadd.f32 %v1829, %v1984
        %v2087 = vadd.f32 %v1830, %v1989
        %v2088 = vadd.f32 %v1831, %v1994
        %v2089 = vadd.f32 %v1832, %v1999
        %v2090 = vadd.f32 %v1833, %v2004
        %v2091 = vadd.f32 %v1834, %v2009
        %v2092 = vadd.f32 %v1835, %v2014
        %v2093 = vadd.f32 %v1836, %v2019
        %v2094 = vadd.f32 %v1837, %v2024
        %v2095 = vadd.f32 %v1838, %v2029
        %v2096 = vadd.f32 %v1839, %v2034
        %v2097 = vadd.f32 %v1840, %v2039
        %v2098 = vadd.f32 %v1841, %v2044
        %v2099 = vadd.f32 %v1842, %v2049
        %v2100 = vadd.f32 %v1843, %v2054
        %v2101 = vadd.f32 %v1844, %v2059
        %v2102 = vadd.f32 %v1845, %v2064
        %v2103 = vadd.f32 %v1846, %v2069
        %2104 = vst [vmem:[%s412] sm:$0xff] %v2072
        %2105 = vst [vmem:[%s412 + $0x8] sm:$0xff] %v2073
        %2106 = vst [vmem:[%s412 + $0x10] sm:$0xff] %v2074
        %2107 = vst [vmem:[%s412 + $0x18] sm:$0xff] %v2075
        %2108 = vst [vmem:[%s412 + $0x20] sm:$0xff] %v2076
        %2109 = vst [vmem:[%s412 + $0x28] sm:$0xff] %v2077
        %2110 = vst [vmem:[%s412 + $0x30] sm:$0xff] %v2078
        %2111 = vst [vmem:[%s412 + $0x38] sm:$0xff] %v2079
        %2112 = vst [vmem:[%s412 + $0x40] sm:$0xff] %v2080
        %2113 = vst [vmem:[%s412 + $0x48] sm:$0xff] %v2081
        %2114 = vst [vmem:[%s412 + $0x50] sm:$0xff] %v2082
        %2115 = vst [vmem:[%s412 + $0x58] sm:$0xff] %v2083
        %2116 = vst [vmem:[%s412 + $0x60] sm:$0xff] %v2084
        %2117 = vst [vmem:[%s412 + $0x68] sm:$0xff] %v2085
        %2118 = vst [vmem:[%s412 + $0x70] sm:$0xff] %v2086
        %2119 = vst [vmem:[%s412 + $0x78] sm:$0xff] %v2087
        %2120 = vst [vmem:[%s412 + $0x80] sm:$0xff] %v2088
        %2121 = vst [vmem:[%s412 + $0x88] sm:$0xff] %v2089
        %2122 = vst [vmem:[%s412 + $0x90] sm:$0xff] %v2090
        %2123 = vst [vmem:[%s412 + $0x98] sm:$0xff] %v2091
        %2124 = vst [vmem:[%s412 + $0xa0] sm:$0xff] %v2092
        %2125 = vst [vmem:[%s412 + $0xa8] sm:$0xff] %v2093
        %2126 = vst [vmem:[%s412 + $0xb0] sm:$0xff] %v2094
        %2127 = vst [vmem:[%s412 + $0xb8] sm:$0xff] %v2095
        %2128 = vst [vmem:[%s412 + $0xc0] sm:$0xff] %v2096
        %2129 = vst [vmem:[%s412 + $0xc8] sm:$0xff] %v2097
        %2130 = vst [vmem:[%s412 + $0xd0] sm:$0xff] %v2098
        %2131 = vst [vmem:[%s412 + $0xd8] sm:$0xff] %v2099
        %2132 = vst [vmem:[%s412 + $0xe0] sm:$0xff] %v2100
        %2133 = vst [vmem:[%s412 + $0xe8] sm:$0xff] %v2101
        %2134 = vst [vmem:[%s412 + $0xf0] sm:$0xff] %v2102
        %2135 = vst [vmem:[%s412 + $0xf8] sm:$0xff] %v2103
        %s2136 = sand.u32 %s276, 1
        %s2137 = scalar_lea.sflag [#allocation4], %s2136
        %s2138 = sand.u32 %s276, 1
        %s2139 = smul.addr %s2138, 256
        %s2140 = scalar_lea.vmem [#allocation3], %s2139
        // Predicated region
        $region65: #{sanet_forward.1} parent=59 // pred_check
          %p2141 = pneg %p286
        $region66: #{sanet_forward.1} parent=59 // pred_check_branch
          %2143 = sbr.rel (%p2141) target = $region68
        $region67: #{sanet_forward.1} parent=59 // pred_region
          %s2145 = ssub.s32 4096, 4096
          %2146 = vsyncadd %s2137, %s2145
          %s2147 = smul.addr %s28, 32
          %s2148 = smul.addr %s2147, 128
          %s2149 = scalar_lea.hbm %s10, %s2148
          %s2150 = sshll.u32 %s2140, 4
          %s2151 = int_to_ptr.vmem [resolvable:$true] %s2150
          %2156 = dma.vmem_to_hbm [thread:$0]  %s2151, 4096, %s2149, %s2137, 128, 128, 8
        $region68: #{sanet_forward.1} parent=59 // pred_fallthru
          _
      $region60: #{sanet_forward.1} parent=5 // pred_fallthru
        _
      %p2157 = scmp.le.s32.totalorder 2, %s19
      // Predicated region
      $region69: #{sanet_forward.1} parent=5 // pred_check
        %p2158 = pneg %p2157
      $region70: #{sanet_forward.1} parent=5 // pred_check_branch
        %2160 = sbr.rel (%p2158) target = $region72
      $region71: #{sanet_forward.1} parent=5 // pred_region
        %s2161 = ssub.s32 %s19, 2
        // Predicated region
        $region73: #{sanet_forward.1} parent=71 // pred_check
          %p2162 = pneg %p292
        $region74: #{sanet_forward.1} parent=71 // pred_check_branch
          %2164 = sbr.rel (%p2162) target = $region76
        $region75: #{sanet_forward.1} parent=71 // pred_region
          %s2165 = sand.u32 %s277, 1
          %s2166 = scalar_lea.sflag [#allocation4], %s2165
          %s2167 = sand.u32 %s277, 1
          %s2168 = smul.addr %s2167, 256
          %s2169 = scalar_lea.vmem [#allocation3], %s2168
          %2170 = dma.done %s2166, 4096
        $region76: #{sanet_forward.1} parent=71 // pred_fallthru
          _
      $region72: #{sanet_forward.1} parent=5 // pred_fallthru
        _
    $region6: #{sanet_forward.1} parent=1 // loop_footer
      %s23 = sadd.s32 1, %s19
    $region7: #{sanet_forward.1} parent=1 // loop_footer_branch
      %18 = sbr.rel target = $region3
    $region8: #{sanet_forward.1} parent=1 // loop_exit
      _
    %2171 = vsyncpa [#allocation4], 1
    %s2172 = scalar_lea.sflag [#allocation4], 1
    %2173 = vsyncpa %s2172, 1

</llo_original>
